<compile_context>
chip_gen: v6e
topology: v6e:2x2x1
jax: 0.10.0
libtpu: 0.0.40
codegen_flags: <defaults>
</compile_context>

<pallas_src>
import functools
import math

import jax
import jax.numpy as jnp
from jax.experimental import pallas as pl
from jax.experimental.pallas import tpu as pltpu

NEG_INF = -1e30     # finite mask value -> no inf-inf NaN hazards
LN_EPS = 1e-5       # nn.LayerNorm default
_MIB = 1024 * 1024


# ---------------------------------------------------------------------------
# Small helpers
# ---------------------------------------------------------------------------

def _round_up(x, m):
    return ((x + m - 1) // m) * m


_TPU_VMEM_CAP = None


def _vmem_cap():
    """Physical VMEM capacity (fallback 128 MiB if the query is unavailable)."""
    global _TPU_VMEM_CAP
    if _TPU_VMEM_CAP is None:
        try:
            _TPU_VMEM_CAP = int(pltpu.get_tpu_info().vmem_capacity_bytes)
        except Exception:
            _TPU_VMEM_CAP = 128 * _MIB
    return _TPU_VMEM_CAP


def _blk_bytes(shape, dtype):
    """Approximate VMEM bytes of a block, padded to (8, 128) tiling."""
    s = list(shape)
    s[-1] = _round_up(s[-1], 128)
    if len(s) >= 2:
        s[-2] = _round_up(s[-2], 8)
    n = 1
    for v in s:
        n *= v
    return n * jnp.dtype(dtype).itemsize


def _cparams(dim_sem, vmem_est_bytes):
    """CompilerParams with an explicit, footprint-derived scoped-VMEM limit."""
    limit = max(16 * _MIB, 2 * int(vmem_est_bytes))       # headroom
    limit = min(limit, (2 * _vmem_cap()) // 3)             # stay under physical
    return pltpu.CompilerParams(dimension_semantics=dim_sem,
                                vmem_limit_bytes=int(limit))


def _const_spec(shape, index_map):
    """BlockSpec for blocks whose index never changes: single-buffer them."""
    try:
        return pl.BlockSpec(shape, index_map, pipeline_mode=pl.Buffered(1))
    except Exception:       # pipeline_mode unavailable -> default double buffer
        return pl.BlockSpec(shape, index_map)


def _row_tile(m, cap=512):
    """Row tile (multiple of 8, up to `cap`) and padded row count."""
    mp8 = _round_up(m, 8)
    tm = min(cap, mp8)
    return tm, _round_up(mp8, tm)


def _col_tile(n):
    """Lane-dense column tile: full width if not a 128 multiple, else 512/256/128."""
    if n % 128 != 0:
        return n
    for tn in (512, 256, 128):
        if n % tn == 0:
            return tn
    return 128


def _pad_rows(a, mp):
    m = a.shape[0]
    return a if m == mp else jnp.pad(a, ((0, mp - m), (0, 0)))


def _layer_norm(v, w, b, eps=LN_EPS):
    mu = jnp.mean(v, axis=-1, keepdims=True)
    var = jnp.mean((v - mu) ** 2, axis=-1, keepdims=True)
    return (v - mu) * jax.lax.rsqrt(var + eps) * w + b


def _gelu(x):
    # TODO(synk): nn.GELU default is erf-based; tanh approximation differs ~1e-3.
    c = math.sqrt(2.0 / math.pi)
    return 0.5 * x * (1.0 + jnp.tanh(c * (x + 0.044715 * x * x * x)))


# ---------------------------------------------------------------------------
# Kernel 1: pre-LN + QKV projection, tiled over (rows, qkv-output columns)
# ---------------------------------------------------------------------------

def _ln_qkv_kernel(x_ref, lnw_ref, lnb_ref, w_ref, b_ref, o_ref):
    h = _layer_norm(x_ref[...], lnw_ref[...], lnb_ref[...])
    o_ref[...] = (jnp.dot(h.astype(jnp.bfloat16), w_ref[...],
                          preferred_element_type=jnp.float32)
                  + b_ref[...]).astype(o_ref.dtype)


def ln_qkv_proj(xf, lnw, lnb, w, b):
    """xf (M, D) f32 -> (M, 3D) bf16 (Q columns pre-scaled by 1/sqrt(dh))."""
    m, d = xf.shape
    o = w.shape[1]
    tm, mp = _row_tile(m)
    tn = _col_tile(o)
    xp = _pad_rows(xf, mp)

    est = (2 * _blk_bytes((tm, d), jnp.float32)
           + 2 * _blk_bytes((1, d), jnp.float32)
           + 2 * _blk_bytes((d, tn), jnp.bfloat16)
           + 2 * _blk_bytes((1, tn), jnp.float32)
           + 2 * _blk_bytes((tm, tn), jnp.bfloat16))

    out = pl.pallas_call(
        _ln_qkv_kernel,
        out_shape=jax.ShapeDtypeStruct((mp, o), jnp.bfloat16),
        grid=(mp // tm, o // tn),
        in_specs=[pl.BlockSpec((tm, d), lambda i, j: (i, 0)),
                  _const_spec((1, d), lambda i, j: (0, 0)),
                  _const_spec((1, d), lambda i, j: (0, 0)),
                  pl.BlockSpec((d, tn), lambda i, j: (0, j)),
                  pl.BlockSpec((1, tn), lambda i, j: (0, j))],
        out_specs=pl.BlockSpec((tm, tn), lambda i, j: (i, j)),
        compiler_params=_cparams(("parallel", "parallel"), est),
    )(xp, lnw, lnb, w, b)
    return out[:m]


# ---------------------------------------------------------------------------
# Kernel 2: flash-style causal attention
#   grid = (BH tiles, lower-triangular (qi, ki) schedule) via scalar prefetch,
#   so fully-masked KV blocks are never DMA'd.
# ---------------------------------------------------------------------------

def _flash_kernel(qi_ref, ki_ref, q_ref, k_ref, v_ref, o_ref,
                  m_sc, l_sc, acc_sc, *, t):
    s_idx = pl.program_id(1)
    qi = qi_ref[s_idx]
    ki = ki_ref[s_idx]

    @pl.when(ki == 0)
    def _():
        m_sc[...] = jnp.full(m_sc.shape, NEG_INF, jnp.float32)
        l_sc[...] = jnp.zeros(l_sc.shape, jnp.float32)
        acc_sc[...] = jnp.zeros(acc_sc.shape, jnp.float32)

    sc = jnp.einsum("bqd,bkd->bqk", q_ref[...], k_ref[...],
                    preferred_element_type=jnp.float32)        # (bht, t, t)
    row = qi * t + jax.lax.broadcasted_iota(jnp.int32, (t, t), 0)
    col = ki * t + jax.lax.broadcasted_iota(jnp.int32, (t, t), 1)
    sc = jnp.where((col <= row)[None], sc, NEG_INF)

    m_prev = m_sc[...]
    m_new = jnp.maximum(m_prev, sc.max(-1, keepdims=True))
    alpha = jnp.exp(m_prev - m_new)
    p = jnp.exp(sc - m_new)
    l_sc[...] = alpha * l_sc[...] + p.sum(-1, keepdims=True)
    acc_sc[...] = alpha * acc_sc[...] + jnp.einsum(
        "bqk,bkd->bqd", p.astype(jnp.bfloat16), v_ref[...],
        preferred_element_type=jnp.float32)
    m_sc[...] = m_new

    @pl.when(ki == qi)   # last causally-visible KV block for this Q block
    def _():
        o_ref[...] = (acc_sc[...] *
                      pl.reciprocal(l_sc[...], approx=True)).astype(o_ref.dtype)


def flash_attention(q, k, v):
    """q, k, v: (B*H, Lp, dh) bf16 (q pre-scaled) -> (B*H, Lp, dh) bf16."""
    bh, lp, dh = q.shape
    t = min(128, lp)                 # lp is a multiple of t by construction
    nq = lp // t
    bht = next(c for c in (8, 4, 2, 1) if bh % c == 0)

    # Lower-triangular (qi, ki) schedule, ordered qi-major / ki-minor.
    qs, ks = [], []
    for qi in range(nq):
        for ki in range(qi + 1):
            qs.append(qi)
            ks.append(ki)
    n_pairs = len(qs)
    qi_ids = jnp.asarray(qs, jnp.int32)
    ki_ids = jnp.asarray(ks, jnp.int32)

    est = (8 * _blk_bytes((bht, t, dh), jnp.bfloat16)          # q,k,v,o x2 bufs
           + _blk_bytes((bht, t, dh), jnp.float32)             # acc scratch
           + 2 * _blk_bytes((bht, t, 1), jnp.float32))         # m, l scratch

    return pl.pallas_call(
        functools.partial(_flash_kernel, t=t),
        out_shape=jax.ShapeDtypeStruct((bh, lp, dh), jnp.bfloat16),
        grid_spec=pltpu.PrefetchScalarGridSpec(
            num_scalar_prefetch=2,
            grid=(bh // bht, n_pairs),
            in_specs=[pl.BlockSpec((bht, t, dh), lambda b, s, qi, ki: (b, qi[s], 0)),
                      pl.BlockSpec((bht, t, dh), lambda b, s, qi, ki: (b, ki[s], 0)),
                      pl.BlockSpec((bht, t, dh), lambda b, s, qi, ki: (b, ki[s], 0))],
            out_specs=pl.BlockSpec((bht, t, dh), lambda b, s, qi, ki: (b, qi[s], 0)),
            scratch_shapes=[pltpu.VMEM((bht, t, 1), jnp.float32),
                            pltpu.VMEM((bht, t, 1), jnp.float32),
                            pltpu.VMEM((bht, t, dh), jnp.float32)]),
        compiler_params=_cparams(("parallel", "arbitrary"), est),
    )(qi_ids, ki_ids, q, k, v)


# ---------------------------------------------------------------------------
# Kernel 3: attn-out projection + residual + LN2 + MLP(GELU) + residual,
#   tiled over (rows, dff) so only wo + one w1/w2 tile are VMEM-resident.
# ---------------------------------------------------------------------------

def _attn_out_mlp_kernel(x_ref, ctx_ref, wo_ref, bo_ref, ln2w_ref, ln2b_ref,
                         w1_ref, b1_ref, w2_ref, b2_ref, o_ref,
                         x_sc, h_sc, acc_sc):
    j = pl.program_id(1)

    @pl.when(j == 0)
    def _():
        x = x_ref[...] + (jnp.dot(ctx_ref[...], wo_ref[...],
                                  preferred_element_type=jnp.float32)
                          + bo_ref[...])
        x_sc[...] = x
        h_sc[...] = _layer_norm(x, ln2w_ref[...], ln2b_ref[...]).astype(jnp.bfloat16)
        acc_sc[...] = jnp.zeros(acc_sc.shape, jnp.float32)

    hh = (jnp.dot(h_sc[...], w1_ref[...], preferred_element_type=jnp.float32)
          + b1_ref[...])
    hh = _gelu(hh)
    acc_sc[...] += jnp.dot(hh.astype(jnp.bfloat16), w2_ref[...],
                           preferred_element_type=jnp.float32)

    @pl.when(j == pl.num_programs(1) - 1)
    def _():
        o_ref[...] = x_sc[...] + acc_sc[...] + b2_ref[...]


def attn_out_mlp(xf, ctx, wo, bo, ln2w, ln2b, w1, b1, w2, b2):
    m, d = xf.shape
    dff = w1.shape[1]
    cap = 256 if _vmem_cap() <= 64 * _MIB else 512     # smaller rows on v7x
    tm, mp = _row_tile(m, cap=cap)
    tf = _col_tile(dff)
    xp = _pad_rows(xf, mp)
    cp = _pad_rows(ctx, mp)

    est = (2 * _blk_bytes((tm, d), jnp.float32)        # x
           + 2 * _blk_bytes((tm, d), jnp.bfloat16)     # ctx
           + _blk_bytes((d, d), jnp.bfloat16)          # wo (single buffered)
           + 4 * _blk_bytes((1, d), jnp.float32)
           + 2 * _blk_bytes((d, tf), jnp.bfloat16)     # w1 tile
           + 2 * _blk_bytes((1, tf), jnp.float32)
           + 2 * _blk_bytes((tf, d), jnp.bfloat16)     # w2 tile
           + 2 * _blk_bytes((tm, d), jnp.float32)      # out
           + 2 * _blk_bytes((tm, d), jnp.float32)      # x_sc + acc_sc
           + _blk_bytes((tm, d), jnp.bfloat16))        # h_sc

    out = pl.pallas_call(
        _attn_out_mlp_kernel,
        out_shape=jax.ShapeDtypeStruct((mp, d), jnp.float32),
        grid=(mp // tm, dff // tf),
        in_specs=[pl.BlockSpec((tm, d), lambda i, j: (i, 0)),
                  pl.BlockSpec((tm, d), lambda i, j: (i, 0)),
                  _const_spec((d, d), lambda i, j: (0, 0)),
                  _const_spec((1, d), lambda i, j: (0, 0)),
                  _const_spec((1, d), lambda i, j: (0, 0)),
                  _const_spec((1, d), lambda i, j: (0, 0)),
                  pl.BlockSpec((d, tf), lambda i, j: (0, j)),
                  pl.BlockSpec((1, tf), lambda i, j: (0, j)),
                  pl.BlockSpec((tf, d), lambda i, j: (j, 0)),
                  _const_spec((1, d), lambda i, j: (0, 0))],
        out_specs=pl.BlockSpec((tm, d), lambda i, j: (i, 0)),
        scratch_shapes=[pltpu.VMEM((tm, d), jnp.float32),
                        pltpu.VMEM((tm, d), jnp.bfloat16),
                        pltpu.VMEM((tm, d), jnp.float32)],
        compiler_params=_cparams(("parallel", "arbitrary"), est),
    )(xp, cp, wo, bo, ln2w, ln2b, w1, b1, w2, b2)
    return out[:m]


# ---------------------------------------------------------------------------
# Final vocab projection, tiled (rows up to 1024) x (vocab, padded to 128)
# ---------------------------------------------------------------------------

def _linear_kernel(x_ref, w_ref, b_ref, o_ref):
    o_ref[...] = (jnp.dot(x_ref[...], w_ref[...],
                          preferred_element_type=jnp.float32) + b_ref[...])


def final_linear(xf, w, b):
    m, d = xf.shape
    v = w.shape[1]
    tm, mp = _row_tile(m, cap=1024)
    vp = _round_up(v, 128)
    tn = _col_tile(vp)
    xp = _pad_rows(xf.astype(jnp.bfloat16), mp)
    wp = jnp.pad(w, ((0, 0), (0, vp - v))) if vp != v else w
    bp = jnp.pad(b, ((0, 0), (0, vp - v))) if vp != v else b

    est = (2 * _blk_bytes((tm, d), jnp.bfloat16)
           + 2 * _blk_bytes((d, tn), jnp.bfloat16)
           + 2 * _blk_bytes((1, tn), jnp.float32)
           + 2 * _blk_bytes((tm, tn), jnp.float32))

    out = pl.pallas_call(
        _linear_kernel,
        out_shape=jax.ShapeDtypeStruct((mp, vp), jnp.float32),
        grid=(mp // tm, vp // tn),
        in_specs=[pl.BlockSpec((tm, d), lambda i, j: (i, 0)),
                  pl.BlockSpec((d, tn), lambda i, j: (0, j)),
                  pl.BlockSpec((1, tn), lambda i, j: (0, j))],
        out_specs=pl.BlockSpec((tm, tn), lambda i, j: (i, j)),
        compiler_params=_cparams(("parallel", "parallel"), est),
    )(xp, wp, bp)
    return out[:m, :v]


# ---------------------------------------------------------------------------
# Full forward
# ---------------------------------------------------------------------------

def transformer_forward(tokens, params, n_heads):
    """tokens: (B, L) int32 -> logits (B, L, emb_num)."""
    tok_emb = params["tok_emb"]                 # (emb_num, D)
    pos_emb = params["pos_emb"]                 # (block_size, D)
    b, l = tokens.shape
    d = tok_emb.shape[1]
    h = n_heads
    dh = d // h

    x = jnp.take(tok_emb, tokens, axis=0) + pos_emb[None, :l, :]
    # self.drop(x): Dropout(0.1) -> identity in eval mode
    xf = x.reshape(b * l, d)

    # Sequence padding for attention: bounded tiles (<=128) on all generations.
    l8 = _round_up(l, 8)
    lpad = l8 if l8 <= 128 else _round_up(l, 128)

    for layer in params["layers"]:
        # LN1 + fused QKV projection (q pre-scaled by 1/sqrt(dh) via the weights)
        qkv = ln_qkv_proj(xf, layer["ln1w"], layer["ln1b"],
                          layer["wqkv"], layer["bqkv"])          # (B*L, 3D) bf16
        # Single combined reshape/transpose to head layout (no split / scale ops).
        qkv = qkv.reshape(b, l, 3, h, dh)
        qkv = jnp.transpose(qkv, (2, 0, 3, 1, 4)).reshape(3, b * h, l, dh)
        if lpad != l:
            qkv = jnp.pad(qkv, ((0, 0), (0, 0), (0, lpad - l), (0, 0)))
        ctx = flash_attention(qkv[0], qkv[1], qkv[2])            # (B*H, Lp, dh) bf16
        ctx = ctx[:, :l].reshape(b, h, l, dh)
        ctx = jnp.transpose(ctx, (0, 2, 1, 3)).reshape(b * l, d)  # bf16
        # TODO(synk): writing ctx straight back into (B, L, D) inside the flash
        #             kernel (per-head output blocks) would remove this transpose
        #             but needs dh to be a multiple of 128 lanes.
        xf = attn_out_mlp(xf, ctx, layer["wo"], layer["bo"],
                          layer["ln2w"], layer["ln2b"],
                          layer["w1"], layer["b1"], layer["w2"], layer["b2"])

    logits = final_linear(xf, params["lin_w"], params["lin_b"])
    return logits.reshape(b, l, -1)


# ---------------------------------------------------------------------------
# Deterministic parameter init (mirrors _init_weights: N(0, 0.02) weights,
# zero biases, LayerNorm weight=1 / bias=0). Matmul weights in (in, out)
# layout, bf16 for MXU; the 1/sqrt(dh) attention scale is folded into the
# Q columns of wqkv / bqkv.
# ---------------------------------------------------------------------------

def init_params(key, *, emb_num, emb_dim, block_size, depth, n_heads):
    d = emb_dim
    dh = d // n_heads
    q_scale = 1.0 / math.sqrt(dh)
    keys = iter(jax.random.split(key, 3 + 4 * depth))
    nrm = lambda shape: jax.random.normal(next(keys), shape, jnp.float32) * 0.02

    params = {
        "tok_emb": nrm((emb_num, d)),
        "pos_emb": nrm((block_size, d)),
        "lin_w": nrm((d, emb_num)).astype(jnp.bfloat16),
        "lin_b": jnp.zeros((1, emb_num), jnp.float32),
        "layers": [],
    }
    for _ in range(depth):
        wqkv = nrm((d, 3 * d))
        wqkv = wqkv.at[:, :d].multiply(q_scale)                # fold attention scale
        bqkv = jnp.zeros((1, 3 * d), jnp.float32)
        bqkv = bqkv.at[:, :d].multiply(q_scale)
        params["layers"].append({
            "ln1w": jnp.ones((1, d), jnp.float32),
            "ln1b": jnp.zeros((1, d), jnp.float32),
            "wqkv": wqkv.astype(jnp.bfloat16),
            "bqkv": bqkv,
            "wo": nrm((d, d)).astype(jnp.bfloat16),
            "bo": jnp.zeros((1, d), jnp.float32),
            "ln2w": jnp.ones((1, d), jnp.float32),
            "ln2b": jnp.zeros((1, d), jnp.float32),
            "w1": nrm((d, 4 * d)).astype(jnp.bfloat16),
            "b1": jnp.zeros((1, 4 * d), jnp.float32),
            "w2": nrm((4 * d, d)).astype(jnp.bfloat16),
            "b2": jnp.zeros((1, d), jnp.float32),
        })
    return params


# ---------------------------------------------------------------------------
# Main
# ---------------------------------------------------------------------------

if __name__ == "__main__":
    EMB_DIM = 32      # hidden
    EMB_NUM = 16      # vocab
    BLOCK_SIZE = 8    # max sequence length
    N_HEADS = 2
    DEPTH = 2
    B, L = 2, 8

    key = jax.random.PRNGKey(0)
    k_param, k_tok = jax.random.split(key)
    params = init_params(k_param, emb_num=EMB_NUM, emb_dim=EMB_DIM,
                         block_size=BLOCK_SIZE, depth=DEPTH, n_heads=N_HEADS)
    tokens = jax.random.randint(k_tok, (B, L), 0, EMB_NUM, dtype=jnp.int32)

    fwd = jax.jit(functools.partial(transformer_forward, n_heads=N_HEADS))
    logits = jax.block_until_ready(fwd(tokens, params))

    assert logits.shape == (B, L, EMB_NUM), logits.shape
    assert bool(jnp.all(jnp.isfinite(logits)))
    print("KERNEL_OK")
</pallas_src>

<mosaic_0001>
module attributes {stable_mosaic.version = 11 : i64} {
  func.func @_flash_kernel(%arg0: i32, %arg1: i32, %arg2: memref<1xi32, #tpu.memory_space<smem>>, %arg3: memref<1xi32, #tpu.memory_space<smem>>, %arg4: memref<4x8x16xbf16, #tpu.memory_space<vmem>>, %arg5: memref<4x8x16xbf16, #tpu.memory_space<vmem>>, %arg6: memref<4x8x16xbf16, #tpu.memory_space<vmem>>, %arg7: memref<4x8x16xbf16, #tpu.memory_space<vmem>>, %arg8: memref<4x8x1xf32, #tpu.memory_space<vmem>>, %arg9: memref<4x8x1xf32, #tpu.memory_space<vmem>>, %arg10: memref<4x8x16xf32, #tpu.memory_space<vmem>>) attributes {dimension_semantics = [#tpu.dimension_semantics<parallel>, #tpu.dimension_semantics<arbitrary>], iteration_bounds = array<i64: 1, 1>, scalar_prefetch = 2 : i64, scratch_operands = 3 : i64, tpu.core_type = #tpu.core_type<tc>, window_params = [{transform_indices = @transform_0, window_bounds = array<i64: 4, 8, 16>}, {transform_indices = @transform_1, window_bounds = array<i64: 4, 8, 16>}, {transform_indices = @transform_2, window_bounds = array<i64: 4, 8, 16>}, {transform_indices = @transform_3, window_bounds = array<i64: 4, 8, 16>}]} {
    %0 = arith.index_cast %arg1 : i32 to index
    %1 = memref.load %arg2[%0] : memref<1xi32, #tpu.memory_space<smem>>
    %2 = arith.index_cast %arg1 : i32 to index
    %3 = memref.load %arg3[%2] : memref<1xi32, #tpu.memory_space<smem>>
    %c0_i32 = arith.constant 0 : i32
    %4 = arith.cmpi eq, %3, %c0_i32 : i32
    %5 = arith.extui %4 : i1 to i32
    %c0_i32_0 = arith.constant 0 : i32
    %6 = arith.cmpi ne, %5, %c0_i32_0 : i32
    scf.if %6 {
      %cst_33 = arith.constant -1.000000e+30 : f32
      %51 = vector.broadcast %cst_33 : f32 to vector<4x8x1xf32>
      %c0_34 = arith.constant 0 : index
      %c0_35 = arith.constant 0 : index
      %c0_36 = arith.constant 0 : index
      %52 = vector.load %arg8[%c0_34, %c0_35, %c0_36] : memref<4x8x1xf32, #tpu.memory_space<vmem>>, vector<4x8x1xf32>
      tpu.vector_store %arg8[%c0_34, %c0_35, %c0_36], %51 {strides = array<i32>} : memref<4x8x1xf32, #tpu.memory_space<vmem>>, vector<4x8x1xf32>,
      %cst_37 = arith.constant 0.000000e+00 : f32
      %53 = vector.broadcast %cst_37 : f32 to vector<4x8x1xf32>
      %c0_38 = arith.constant 0 : index
      %c0_39 = arith.constant 0 : index
      %c0_40 = arith.constant 0 : index
      %54 = vector.load %arg9[%c0_38, %c0_39, %c0_40] : memref<4x8x1xf32, #tpu.memory_space<vmem>>, vector<4x8x1xf32>
      tpu.vector_store %arg9[%c0_38, %c0_39, %c0_40], %53 {strides = array<i32>} : memref<4x8x1xf32, #tpu.memory_space<vmem>>, vector<4x8x1xf32>,
      %cst_41 = arith.constant 0.000000e+00 : f32
      %55 = vector.broadcast %cst_41 : f32 to vector<4x8x16xf32>
      %c0_42 = arith.constant 0 : index
      %c0_43 = arith.constant 0 : index
      %c0_44 = arith.constant 0 : index
      %56 = vector.load %arg10[%c0_42, %c0_43, %c0_44] : memref<4x8x16xf32, #tpu.memory_space<vmem>>, vector<4x8x16xf32>
      tpu.vector_store %arg10[%c0_42, %c0_43, %c0_44], %55 {strides = array<i32>} : memref<4x8x16xf32, #tpu.memory_space<vmem>>, vector<4x8x16xf32>,
    } else {
    }
    %c0 = arith.constant 0 : index
    %c0_1 = arith.constant 0 : index
    %c0_2 = arith.constant 0 : index
    %7 = vector.load %arg4[%c0, %c0_1, %c0_2] : memref<4x8x16xbf16, #tpu.memory_space<vmem>>, vector<4x8x16xbf16>
    %c0_3 = arith.constant 0 : index
    %c0_4 = arith.constant 0 : index
    %c0_5 = arith.constant 0 : index
    %8 = vector.load %arg5[%c0_3, %c0_4, %c0_5] : memref<4x8x16xbf16, #tpu.memory_space<vmem>>, vector<4x8x16xbf16>
    "tpu.trace_start"() <{level = 10 : i32, message = "bqd,bkd->bqk"}> : () -> ()
    %cst = arith.constant dense<0.000000e+00> : vector<4x8x8xf32>
    %9 = tpu.matmul %7, %8, %cst {dimension_numbers = #tpu.dot_dimension_numbers<[2], [2], [1], [1], [0, 0, 0, 1, 1, 1], [0], [0]>} : vector<4x8x16xbf16>, vector<4x8x16xbf16>, vector<4x8x8xf32> -> vector<4x8x8xf32>
    "tpu.trace_stop"() : () -> ()
    %c8_i32 = arith.constant 8 : i32
    %10 = arith.muli %1, %c8_i32 : i32
    %11 = tpu.iota {dimensions = array<i32: 0>} : vector<8x8xi32>
    %12 = vector.broadcast %10 : i32 to vector<8x8xi32>
    %13 = arith.addi %12, %11 : vector<8x8xi32>
    %c8_i32_6 = arith.constant 8 : i32
    %14 = arith.muli %3, %c8_i32_6 : i32
    %15 = tpu.iota {dimensions = array<i32: 1>} : vector<8x8xi32>
    %16 = vector.broadcast %14 : i32 to vector<8x8xi32>
    %17 = arith.addi %16, %15 : vector<8x8xi32>
    %18 = arith.cmpi sle, %17, %13 : vector<8x8xi32>
    %19 = vector.shape_cast %18 : vector<8x8xi1> to vector<1x8x8xi1>
    %cst_7 = arith.constant -1.000000e+30 : f32
    %20 = vector.shape_cast %19 : vector<1x8x8xi1> to vector<1x8x8xi1>
    %21 = vector.broadcast %20 : vector<1x8x8xi1> to vector<4x8x8xi1>
    %22 = vector.broadcast %cst_7 : f32 to vector<4x8x8xf32>
    %23 = arith.select %21, %9, %22 : vector<4x8x8xi1>, vector<4x8x8xf32>
    %c0_8 = arith.constant 0 : index
    %c0_9 = arith.constant 0 : index
    %c0_10 = arith.constant 0 : index
    %24 = vector.load %arg8[%c0_8, %c0_9, %c0_10] : memref<4x8x1xf32, #tpu.memory_space<vmem>>, vector<4x8x1xf32>
    %cst_11 = arith.constant dense<0xFF800000> : vector<4x8xf32>
    %25 = vector.multi_reduction <maximumf>, %23, %cst_11 [2] : vector<4x8x8xf32> to vector<4x8xf32>
    %26 = vector.shape_cast %25 : vector<4x8xf32> to vector<4x8x1xf32>
    %27 = arith.maximumf %24, %26 : vector<4x8x1xf32>
    %28 = arith.subf %24, %27 : vector<4x8x1xf32>
    %29 = math.exp %28 : vector<4x8x1xf32>
    %30 = vector.broadcast %27 : vector<4x8x1xf32> to vector<4x8x8xf32>
    %31 = arith.subf %23, %30 : vector<4x8x8xf32>
    %32 = math.exp %31 : vector<4x8x8xf32>
    %c0_12 = arith.constant 0 : index
    %c0_13 = arith.constant 0 : index
    %c0_14 = arith.constant 0 : index
    %33 = vector.load %arg9[%c0_12, %c0_13, %c0_14] : memref<4x8x1xf32, #tpu.memory_space<vmem>>, vector<4x8x1xf32>
    %34 = arith.mulf %29, %33 : vector<4x8x1xf32>
    %cst_15 = arith.constant dense<0.000000e+00> : vector<4x8xf32>
    %35 = vector.multi_reduction <add>, %32, %cst_15 [2] : vector<4x8x8xf32> to vector<4x8xf32>
    %36 = vector.shape_cast %35 : vector<4x8xf32> to vector<4x8x1xf32>
    %37 = arith.addf %34, %36 : vector<4x8x1xf32>
    %c0_16 = arith.constant 0 : index
    %c0_17 = arith.constant 0 : index
    %c0_18 = arith.constant 0 : index
    %38 = vector.load %arg9[%c0_16, %c0_17, %c0_18] : memref<4x8x1xf32, #tpu.memory_space<vmem>>, vector<4x8x1xf32>
    tpu.vector_store %arg9[%c0_16, %c0_17, %c0_18], %37 {strides = array<i32>} : memref<4x8x1xf32, #tpu.memory_space<vmem>>, vector<4x8x1xf32>,
    %c0_19 = arith.constant 0 : index
    %c0_20 = arith.constant 0 : index
    %c0_21 = arith.constant 0 : index
    %39 = vector.load %arg10[%c0_19, %c0_20, %c0_21] : memref<4x8x16xf32, #tpu.memory_space<vmem>>, vector<4x8x16xf32>
    %40 = vector.broadcast %29 : vector<4x8x1xf32> to vector<4x8x16xf32>
    %41 = arith.mulf %40, %39 : vector<4x8x16xf32>
    %42 = arith.truncf %32 : vector<4x8x8xf32> to vector<4x8x8xbf16>
    %c0_22 = arith.constant 0 : index
    %c0_23 = arith.constant 0 : index
    %c0_24 = arith.constant 0 : index
    %43 = vector.load %arg6[%c0_22, %c0_23, %c0_24] : memref<4x8x16xbf16, #tpu.memory_space<vmem>>, vector<4x8x16xbf16>
    "tpu.trace_start"() <{level = 10 : i32, message = "bqk,bkd->bqd"}> : () -> ()
    %cst_25 = arith.constant dense<0.000000e+00> : vector<4x8x16xf32>
    %44 = tpu.matmul %42, %43, %cst_25 {dimension_numbers = #tpu.dot_dimension_numbers<[2], [1], [1], [2], [0, 0, 0, 1, 1, 2], [0], [0]>} : vector<4x8x8xbf16>, vector<4x8x16xbf16>, vector<4x8x16xf32> -> vector<4x8x16xf32>
    "tpu.trace_stop"() : () -> ()
    %45 = arith.addf %41, %44 : vector<4x8x16xf32>
    %c0_26 = arith.constant 0 : index
    %c0_27 = arith.constant 0 : index
    %c0_28 = arith.constant 0 : index
    %46 = vector.load %arg10[%c0_26, %c0_27, %c0_28] : memref<4x8x16xf32, #tpu.memory_space<vmem>>, vector<4x8x16xf32>
    tpu.vector_store %arg10[%c0_26, %c0_27, %c0_28], %45 {strides = array<i32>} : memref<4x8x16xf32, #tpu.memory_space<vmem>>, vector<4x8x16xf32>,
    %c0_29 = arith.constant 0 : index
    %c0_30 = arith.constant 0 : index
    %c0_31 = arith.constant 0 : index
    %47 = vector.load %arg8[%c0_29, %c0_30, %c0_31] : memref<4x8x1xf32, #tpu.memory_space<vmem>>, vector<4x8x1xf32>
    tpu.vector_store %arg8[%c0_29, %c0_30, %c0_31], %27 {strides = array<i32>} : memref<4x8x1xf32, #tpu.memory_space<vmem>>, vector<4x8x1xf32>,
    %48 = arith.cmpi eq, %3, %1 : i32
    %49 = arith.extui %48 : i1 to i32
    %c0_i32_32 = arith.constant 0 : i32
    %50 = arith.cmpi ne, %49, %c0_i32_32 : i32
    scf.if %50 {
      %c0_33 = arith.constant 0 : index
      %c0_34 = arith.constant 0 : index
      %c0_35 = arith.constant 0 : index
      %51 = vector.load %arg10[%c0_33, %c0_34, %c0_35] : memref<4x8x16xf32, #tpu.memory_space<vmem>>, vector<4x8x16xf32>
      %c0_36 = arith.constant 0 : index
      %c0_37 = arith.constant 0 : index
      %c0_38 = arith.constant 0 : index
      %52 = vector.load %arg9[%c0_36, %c0_37, %c0_38] : memref<4x8x1xf32, #tpu.memory_space<vmem>>, vector<4x8x1xf32>
      %53 = tpu.reciprocal %52 {approx = true} : vector<4x8x1xf32> -> vector<4x8x1xf32>
      %54 = vector.broadcast %53 : vector<4x8x1xf32> to vector<4x8x16xf32>
      %55 = arith.mulf %51, %54 : vector<4x8x16xf32>
      %56 = arith.truncf %55 : vector<4x8x16xf32> to vector<4x8x16xbf16>
      %c0_39 = arith.constant 0 : index
      %c0_40 = arith.constant 0 : index
      %c0_41 = arith.constant 0 : index
      %57 = vector.load %arg7[%c0_39, %c0_40, %c0_41] : memref<4x8x16xbf16, #tpu.memory_space<vmem>>, vector<4x8x16xbf16>
      tpu.vector_store %arg7[%c0_39, %c0_40, %c0_41], %56 {strides = array<i32>} : memref<4x8x16xbf16, #tpu.memory_space<vmem>>, vector<4x8x16xbf16>,
    } else {
    }
    return
  }
  func.func @transform_0(%arg0: i32, %arg1: i32, %arg2: memref<1xi32, #tpu.memory_space<smem>>, %arg3: memref<1xi32, #tpu.memory_space<smem>>) -> (i32, i32, i32) {
    %0 = arith.index_cast %arg1 : i32 to index
    %1 = memref.load %arg2[%0] : memref<1xi32, #tpu.memory_space<smem>>
    %c0_i32 = arith.constant 0 : i32
    %c0_i32_0 = arith.constant 0 : i32
    return %arg0, %1, %c0_i32 : i32, i32, i32
  }
  func.func @transform_1(%arg0: i32, %arg1: i32, %arg2: memref<1xi32, #tpu.memory_space<smem>>, %arg3: memref<1xi32, #tpu.memory_space<smem>>) -> (i32, i32, i32) {
    %0 = arith.index_cast %arg1 : i32 to index
    %1 = memref.load %arg3[%0] : memref<1xi32, #tpu.memory_space<smem>>
    %c0_i32 = arith.constant 0 : i32
    %c0_i32_0 = arith.constant 0 : i32
    return %arg0, %1, %c0_i32 : i32, i32, i32
  }
  func.func @transform_2(%arg0: i32, %arg1: i32, %arg2: memref<1xi32, #tpu.memory_space<smem>>, %arg3: memref<1xi32, #tpu.memory_space<smem>>) -> (i32, i32, i32) {
    %0 = arith.index_cast %arg1 : i32 to index
    %1 = memref.load %arg3[%0] : memref<1xi32, #tpu.memory_space<smem>>
    %c0_i32 = arith.constant 0 : i32
    %c0_i32_0 = arith.constant 0 : i32
    return %arg0, %1, %c0_i32 : i32, i32, i32
  }
  func.func @transform_3(%arg0: i32, %arg1: i32, %arg2: memref<1xi32, #tpu.memory_space<smem>>, %arg3: memref<1xi32, #tpu.memory_space<smem>>) -> (i32, i32, i32) {
    %0 = arith.index_cast %arg1 : i32 to index
    %1 = memref.load %arg2[%0] : memref<1xi32, #tpu.memory_space<smem>>
    %c0_i32 = arith.constant 0 : i32
    %c0_i32_0 = arith.constant 0 : i32
    return %arg0, %1, %c0_i32 : i32, i32, i32
  }
}

module attributes {stable_mosaic.version = 11 : i64} {
  func.func @_ln_qkv_kernel(%arg0: i32, %arg1: i32, %arg2: memref<16x32xf32, #tpu.memory_space<vmem>>, %arg3: memref<1x32xf32, #tpu.memory_space<vmem>>, %arg4: memref<1x32xf32, #tpu.memory_space<vmem>>, %arg5: memref<32x96xbf16, #tpu.memory_space<vmem>>, %arg6: memref<1x96xf32, #tpu.memory_space<vmem>>, %arg7: memref<16x96xbf16, #tpu.memory_space<vmem>>) attributes {dimension_semantics = [#tpu.dimension_semantics<parallel>, #tpu.dimension_semantics<parallel>], iteration_bounds = array<i64: 1, 1>, scalar_prefetch = 0 : i64, scratch_operands = 0 : i64, tpu.core_type = #tpu.core_type<tc>, window_params = [{transform_indices = @transform_0, window_bounds = array<i64: 16, 32>}, {pipeline_mode = #tpu.pipeline_mode<synchronous>, transform_indices = @transform_1, window_bounds = array<i64: 1, 32>}, {pipeline_mode = #tpu.pipeline_mode<synchronous>, transform_indices = @transform_2, window_bounds = array<i64: 1, 32>}, {transform_indices = @transform_3, window_bounds = array<i64: 32, 96>}, {transform_indices = @transform_4, window_bounds = array<i64: 1, 96>}, {transform_indices = @transform_5, window_bounds = array<i64: 16, 96>}]} {
    %c0 = arith.constant 0 : index
    %c0_0 = arith.constant 0 : index
    %0 = vector.load %arg2[%c0, %c0_0] : memref<16x32xf32, #tpu.memory_space<vmem>>, vector<16x32xf32>
    %c0_1 = arith.constant 0 : index
    %c0_2 = arith.constant 0 : index
    %1 = vector.load %arg3[%c0_1, %c0_2] : memref<1x32xf32, #tpu.memory_space<vmem>>, vector<1x32xf32>
    %c0_3 = arith.constant 0 : index
    %c0_4 = arith.constant 0 : index
    %2 = vector.load %arg4[%c0_3, %c0_4] : memref<1x32xf32, #tpu.memory_space<vmem>>, vector<1x32xf32>
    %cst = arith.constant dense<0.000000e+00> : vector<16xf32>
    %3 = vector.multi_reduction <add>, %0, %cst [1] : vector<16x32xf32> to vector<16xf32>
    %4 = vector.shape_cast %3 : vector<16xf32> to vector<16x1xf32>
    %cst_5 = arith.constant 3.200000e+01 : f32
    %5 = vector.broadcast %cst_5 : f32 to vector<16x1xf32>
    %6 = arith.divf %4, %5 : vector<16x1xf32>
    %7 = vector.broadcast %6 : vector<16x1xf32> to vector<16x32xf32>
    %8 = arith.subf %0, %7 : vector<16x32xf32>
    %9 = arith.mulf %8, %8 : vector<16x32xf32>
    %cst_6 = arith.constant dense<0.000000e+00> : vector<16xf32>
    %10 = vector.multi_reduction <add>, %9, %cst_6 [1] : vector<16x32xf32> to vector<16xf32>
    %11 = vector.shape_cast %10 : vector<16xf32> to vector<16x1xf32>
    %cst_7 = arith.constant 3.200000e+01 : f32
    %12 = vector.broadcast %cst_7 : f32 to vector<16x1xf32>
    %13 = arith.divf %11, %12 : vector<16x1xf32>
    %14 = vector.broadcast %6 : vector<16x1xf32> to vector<16x32xf32>
    %15 = arith.subf %0, %14 : vector<16x32xf32>
    %cst_8 = arith.constant 9.99999974E-6 : f32
    %16 = vector.broadcast %cst_8 : f32 to vector<16x1xf32>
    %17 = arith.addf %13, %16 : vector<16x1xf32>
    %18 = math.rsqrt %17 : vector<16x1xf32>
    %19 = vector.broadcast %18 : vector<16x1xf32> to vector<16x32xf32>
    %20 = arith.mulf %15, %19 : vector<16x32xf32>
    %21 = vector.broadcast %1 : vector<1x32xf32> to vector<16x32xf32>
    %22 = arith.mulf %20, %21 : vector<16x32xf32>
    %23 = vector.broadcast %2 : vector<1x32xf32> to vector<16x32xf32>
    %24 = arith.addf %22, %23 : vector<16x32xf32>
    %25 = arith.truncf %24 : vector<16x32xf32> to vector<16x32xbf16>
    %c0_9 = arith.constant 0 : index
    %c0_10 = arith.constant 0 : index
    %26 = vector.load %arg5[%c0_9, %c0_10] : memref<32x96xbf16, #tpu.memory_space<vmem>>, vector<32x96xbf16>
    %cst_11 = arith.constant dense<0.000000e+00> : vector<16x96xf32>
    %27 = tpu.matmul %25, %26, %cst_11 {dimension_numbers = #tpu.dot_dimension_numbers<[1], [0], [0], [1], [0, 0, 1, 1], [], []>} : vector<16x32xbf16>, vector<32x96xbf16>, vector<16x96xf32> -> vector<16x96xf32>
    %c0_12 = arith.constant 0 : index
    %c0_13 = arith.constant 0 : index
    %28 = vector.load %arg6[%c0_12, %c0_13] : memref<1x96xf32, #tpu.memory_space<vmem>>, vector<1x96xf32>
    %29 = vector.broadcast %28 : vector<1x96xf32> to vector<16x96xf32>
    %30 = arith.addf %27, %29 : vector<16x96xf32>
    %31 = arith.truncf %30 : vector<16x96xf32> to vector<16x96xbf16>
    %c0_14 = arith.constant 0 : index
    %c0_15 = arith.constant 0 : index
    %32 = vector.load %arg7[%c0_14, %c0_15] : memref<16x96xbf16, #tpu.memory_space<vmem>>, vector<16x96xbf16>
    tpu.vector_store %arg7[%c0_14, %c0_15], %31 {strides = array<i32>} : memref<16x96xbf16, #tpu.memory_space<vmem>>, vector<16x96xbf16>,
    return
  }
  func.func @transform_0(%arg0: i32, %arg1: i32) -> (i32, i32) {
    %c0_i32 = arith.constant 0 : i32
    %c0_i32_0 = arith.constant 0 : i32
    return %arg0, %c0_i32 : i32, i32
  }
  func.func @transform_1(%arg0: i32, %arg1: i32) -> (i32, i32) {
    %c0_i32 = arith.constant 0 : i32
    %c0_i32_0 = arith.constant 0 : i32
    %c0_i32_1 = arith.constant 0 : i32
    return %c0_i32, %c0_i32_0 : i32, i32
  }
  func.func @transform_2(%arg0: i32, %arg1: i32) -> (i32, i32) {
    %c0_i32 = arith.constant 0 : i32
    %c0_i32_0 = arith.constant 0 : i32
    %c0_i32_1 = arith.constant 0 : i32
    return %c0_i32, %c0_i32_0 : i32, i32
  }
  func.func @transform_3(%arg0: i32, %arg1: i32) -> (i32, i32) {
    %c0_i32 = arith.constant 0 : i32
    %c0_i32_0 = arith.constant 0 : i32
    return %c0_i32, %arg1 : i32, i32
  }
  func.func @transform_4(%arg0: i32, %arg1: i32) -> (i32, i32) {
    %c0_i32 = arith.constant 0 : i32
    %c0_i32_0 = arith.constant 0 : i32
    return %c0_i32, %arg1 : i32, i32
  }
  func.func @transform_5(%arg0: i32, %arg1: i32) -> (i32, i32) {
    %c0_i32 = arith.constant 0 : i32
    return %arg0, %arg1 : i32, i32
  }
}

module attributes {stable_mosaic.version = 11 : i64} {
  func.func @_attn_out_mlp_kernel(%arg0: i32, %arg1: i32, %arg2: memref<16x32xf32, #tpu.memory_space<vmem>>, %arg3: memref<16x32xbf16, #tpu.memory_space<vmem>>, %arg4: memref<32x32xbf16, #tpu.memory_space<vmem>>, %arg5: memref<1x32xf32, #tpu.memory_space<vmem>>, %arg6: memref<1x32xf32, #tpu.memory_space<vmem>>, %arg7: memref<1x32xf32, #tpu.memory_space<vmem>>, %arg8: memref<32x128xbf16, #tpu.memory_space<vmem>>, %arg9: memref<1x128xf32, #tpu.memory_space<vmem>>, %arg10: memref<128x32xbf16, #tpu.memory_space<vmem>>, %arg11: memref<1x32xf32, #tpu.memory_space<vmem>>, %arg12: memref<16x32xf32, #tpu.memory_space<vmem>>, %arg13: memref<16x32xf32, #tpu.memory_space<vmem>>, %arg14: memref<16x32xbf16, #tpu.memory_space<vmem>>, %arg15: memref<16x32xf32, #tpu.memory_space<vmem>>) attributes {dimension_semantics = [#tpu.dimension_semantics<parallel>, #tpu.dimension_semantics<arbitrary>], iteration_bounds = array<i64: 1, 1>, scalar_prefetch = 0 : i64, scratch_operands = 3 : i64, tpu.core_type = #tpu.core_type<tc>, window_params = [{transform_indices = @transform_0, window_bounds = array<i64: 16, 32>}, {transform_indices = @transform_1, window_bounds = array<i64: 16, 32>}, {pipeline_mode = #tpu.pipeline_mode<synchronous>, transform_indices = @transform_2, window_bounds = array<i64: 32, 32>}, {pipeline_mode = #tpu.pipeline_mode<synchronous>, transform_indices = @transform_3, window_bounds = array<i64: 1, 32>}, {pipeline_mode = #tpu.pipeline_mode<synchronous>, transform_indices = @transform_4, window_bounds = array<i64: 1, 32>}, {pipeline_mode = #tpu.pipeline_mode<synchronous>, transform_indices = @transform_5, window_bounds = array<i64: 1, 32>}, {transform_indices = @transform_6, window_bounds = array<i64: 32, 128>}, {transform_indices = @transform_7, window_bounds = array<i64: 1, 128>}, {transform_indices = @transform_8, window_bounds = array<i64: 128, 32>}, {pipeline_mode = #tpu.pipeline_mode<synchronous>, transform_indices = @transform_9, window_bounds = array<i64: 1, 32>}, {transform_indices = @transform_10, window_bounds = array<i64: 16, 32>}]} {
    %c0_i32 = arith.constant 0 : i32
    %0 = arith.cmpi eq, %arg1, %c0_i32 : i32
    %1 = arith.extui %0 : i1 to i32
    %c0_i32_0 = arith.constant 0 : i32
    %2 = arith.cmpi ne, %1, %c0_i32_0 : i32
    scf.if %2 {
      %c0_19 = arith.constant 0 : index
      %c0_20 = arith.constant 0 : index
      %31 = vector.load %arg2[%c0_19, %c0_20] : memref<16x32xf32, #tpu.memory_space<vmem>>, vector<16x32xf32>
      %c0_21 = arith.constant 0 : index
      %c0_22 = arith.constant 0 : index
      %32 = vector.load %arg3[%c0_21, %c0_22] : memref<16x32xbf16, #tpu.memory_space<vmem>>, vector<16x32xbf16>
      %c0_23 = arith.constant 0 : index
      %c0_24 = arith.constant 0 : index
      %33 = vector.load %arg4[%c0_23, %c0_24] : memref<32x32xbf16, #tpu.memory_space<vmem>>, vector<32x32xbf16>
      %cst_25 = arith.constant dense<0.000000e+00> : vector<16x32xf32>
      %34 = tpu.matmul %32, %33, %cst_25 {dimension_numbers = #tpu.dot_dimension_numbers<[1], [0], [0], [1], [0, 0, 1, 1], [], []>} : vector<16x32xbf16>, vector<32x32xbf16>, vector<16x32xf32> -> vector<16x32xf32>
      %c0_26 = arith.constant 0 : index
      %c0_27 = arith.constant 0 : index
      %35 = vector.load %arg5[%c0_26, %c0_27] : memref<1x32xf32, #tpu.memory_space<vmem>>, vector<1x32xf32>
      %36 = vector.broadcast %35 : vector<1x32xf32> to vector<16x32xf32>
      %37 = arith.addf %34, %36 : vector<16x32xf32>
      %38 = arith.addf %31, %37 : vector<16x32xf32>
      %c0_28 = arith.constant 0 : index
      %c0_29 = arith.constant 0 : index
      %39 = vector.load %arg13[%c0_28, %c0_29] : memref<16x32xf32, #tpu.memory_space<vmem>>, vector<16x32xf32>
      tpu.vector_store %arg13[%c0_28, %c0_29], %38 {strides = array<i32>} : memref<16x32xf32, #tpu.memory_space<vmem>>, vector<16x32xf32>,
      %c0_30 = arith.constant 0 : index
      %c0_31 = arith.constant 0 : index
      %40 = vector.load %arg6[%c0_30, %c0_31] : memref<1x32xf32, #tpu.memory_space<vmem>>, vector<1x32xf32>
      %c0_32 = arith.constant 0 : index
      %c0_33 = arith.constant 0 : index
      %41 = vector.load %arg7[%c0_32, %c0_33] : memref<1x32xf32, #tpu.memory_space<vmem>>, vector<1x32xf32>
      %cst_34 = arith.constant dense<0.000000e+00> : vector<16xf32>
      %42 = vector.multi_reduction <add>, %38, %cst_34 [1] : vector<16x32xf32> to vector<16xf32>
      %43 = vector.shape_cast %42 : vector<16xf32> to vector<16x1xf32>
      %cst_35 = arith.constant 3.200000e+01 : f32
      %44 = vector.broadcast %cst_35 : f32 to vector<16x1xf32>
      %45 = arith.divf %43, %44 : vector<16x1xf32>
      %46 = vector.broadcast %45 : vector<16x1xf32> to vector<16x32xf32>
      %47 = arith.subf %38, %46 : vector<16x32xf32>
      %48 = arith.mulf %47, %47 : vector<16x32xf32>
      %cst_36 = arith.constant dense<0.000000e+00> : vector<16xf32>
      %49 = vector.multi_reduction <add>, %48, %cst_36 [1] : vector<16x32xf32> to vector<16xf32>
      %50 = vector.shape_cast %49 : vector<16xf32> to vector<16x1xf32>
      %cst_37 = arith.constant 3.200000e+01 : f32
      %51 = vector.broadcast %cst_37 : f32 to vector<16x1xf32>
      %52 = arith.divf %50, %51 : vector<16x1xf32>
      %53 = vector.broadcast %45 : vector<16x1xf32> to vector<16x32xf32>
      %54 = arith.subf %38, %53 : vector<16x32xf32>
      %cst_38 = arith.constant 9.99999974E-6 : f32
      %55 = vector.broadcast %cst_38 : f32 to vector<16x1xf32>
      %56 = arith.addf %52, %55 : vector<16x1xf32>
      %57 = math.rsqrt %56 : vector<16x1xf32>
      %58 = vector.broadcast %57 : vector<16x1xf32> to vector<16x32xf32>
      %59 = arith.mulf %54, %58 : vector<16x32xf32>
      %60 = vector.broadcast %40 : vector<1x32xf32> to vector<16x32xf32>
      %61 = arith.mulf %59, %60 : vector<16x32xf32>
      %62 = vector.broadcast %41 : vector<1x32xf32> to vector<16x32xf32>
      %63 = arith.addf %61, %62 : vector<16x32xf32>
      %64 = arith.truncf %63 : vector<16x32xf32> to vector<16x32xbf16>
      %c0_39 = arith.constant 0 : index
      %c0_40 = arith.constant 0 : index
      %65 = vector.load %arg14[%c0_39, %c0_40] : memref<16x32xbf16, #tpu.memory_space<vmem>>, vector<16x32xbf16>
      tpu.vector_store %arg14[%c0_39, %c0_40], %64 {strides = array<i32>} : memref<16x32xbf16, #tpu.memory_space<vmem>>, vector<16x32xbf16>,
      %cst_41 = arith.constant 0.000000e+00 : f32
      %66 = vector.broadcast %cst_41 : f32 to vector<16x32xf32>
      %c0_42 = arith.constant 0 : index
      %c0_43 = arith.constant 0 : index
      %67 = vector.load %arg15[%c0_42, %c0_43] : memref<16x32xf32, #tpu.memory_space<vmem>>, vector<16x32xf32>
      tpu.vector_store %arg15[%c0_42, %c0_43], %66 {strides = array<i32>} : memref<16x32xf32, #tpu.memory_space<vmem>>, vector<16x32xf32>,
    } else {
    }
    %c0 = arith.constant 0 : index
    %c0_1 = arith.constant 0 : index
    %3 = vector.load %arg14[%c0, %c0_1] : memref<16x32xbf16, #tpu.memory_space<vmem>>, vector<16x32xbf16>
    %c0_2 = arith.constant 0 : index
    %c0_3 = arith.constant 0 : index
    %4 = vector.load %arg8[%c0_2, %c0_3] : memref<32x128xbf16, #tpu.memory_space<vmem>>, vector<32x128xbf16>
    %cst = arith.constant dense<0.000000e+00> : vector<16x128xf32>
    %5 = tpu.matmul %3, %4, %cst {dimension_numbers = #tpu.dot_dimension_numbers<[1], [0], [0], [1], [0, 0, 1, 1], [], []>} : vector<16x32xbf16>, vector<32x128xbf16>, vector<16x128xf32> -> vector<16x128xf32>
    %c0_4 = arith.constant 0 : index
    %c0_5 = arith.constant 0 : index
    %6 = vector.load %arg9[%c0_4, %c0_5] : memref<1x128xf32, #tpu.memory_space<vmem>>, vector<1x128xf32>
    %7 = vector.broadcast %6 : vector<1x128xf32> to vector<16x128xf32>
    %8 = arith.addf %5, %7 : vector<16x128xf32>
    %cst_6 = arith.constant 5.000000e-01 : f32
    %9 = vector.broadcast %cst_6 : f32 to vector<16x128xf32>
    %10 = arith.mulf %9, %8 : vector<16x128xf32>
    %cst_7 = arith.constant 4.471500e-02 : f32
    %11 = vector.broadcast %cst_7 : f32 to vector<16x128xf32>
    %12 = arith.mulf %11, %8 : vector<16x128xf32>
    %13 = arith.mulf %12, %8 : vector<16x128xf32>
    %14 = arith.mulf %13, %8 : vector<16x128xf32>
    %15 = arith.addf %8, %14 : vector<16x128xf32>
    %cst_8 = arith.constant 0.797884583 : f32
    %16 = vector.broadcast %cst_8 : f32 to vector<16x128xf32>
    %17 = arith.mulf %16, %15 : vector<16x128xf32>
    %18 = math.tanh %17 : vector<16x128xf32>
    %cst_9 = arith.constant 1.000000e+00 : f32
    %19 = vector.broadcast %cst_9 : f32 to vector<16x128xf32>
    %20 = arith.addf %19, %18 : vector<16x128xf32>
    %21 = arith.mulf %10, %20 : vector<16x128xf32>
    %c0_10 = arith.constant 0 : index
    %c0_11 = arith.constant 0 : index
    %22 = vector.load %arg15[%c0_10, %c0_11] : memref<16x32xf32, #tpu.memory_space<vmem>>, vector<16x32xf32>
    %23 = arith.truncf %21 : vector<16x128xf32> to vector<16x128xbf16>
    %c0_12 = arith.constant 0 : index
    %c0_13 = arith.constant 0 : index
    %24 = vector.load %arg10[%c0_12, %c0_13] : memref<128x32xbf16, #tpu.memory_space<vmem>>, vector<128x32xbf16>
    %cst_14 = arith.constant dense<0.000000e+00> : vector<16x32xf32>
    %25 = tpu.matmul %23, %24, %cst_14 {dimension_numbers = #tpu.dot_dimension_numbers<[1], [0], [0], [1], [0, 0, 1, 1], [], []>} : vector<16x128xbf16>, vector<128x32xbf16>, vector<16x32xf32> -> vector<16x32xf32>
    %26 = arith.addf %22, %25 : vector<16x32xf32>
    %c0_15 = arith.constant 0 : index
    %c0_16 = arith.constant 0 : index
    %27 = vector.load %arg15[%c0_15, %c0_16] : memref<16x32xf32, #tpu.memory_space<vmem>>, vector<16x32xf32>
    tpu.vector_store %arg15[%c0_15, %c0_16], %26 {strides = array<i32>} : memref<16x32xf32, #tpu.memory_space<vmem>>, vector<16x32xf32>,
    %c0_i32_17 = arith.constant 0 : i32
    %28 = arith.cmpi eq, %arg1, %c0_i32_17 : i32
    %29 = arith.extui %28 : i1 to i32
    %c0_i32_18 = arith.constant 0 : i32
    %30 = arith.cmpi ne, %29, %c0_i32_18 : i32
    scf.if %30 {
      %c0_19 = arith.constant 0 : index
      %c0_20 = arith.constant 0 : index
      %31 = vector.load %arg13[%c0_19, %c0_20] : memref<16x32xf32, #tpu.memory_space<vmem>>, vector<16x32xf32>
      %c0_21 = arith.constant 0 : index
      %c0_22 = arith.constant 0 : index
      %32 = vector.load %arg15[%c0_21, %c0_22] : memref<16x32xf32, #tpu.memory_space<vmem>>, vector<16x32xf32>
      %33 = arith.addf %31, %32 : vector<16x32xf32>
      %c0_23 = arith.constant 0 : index
      %c0_24 = arith.constant 0 : index
      %34 = vector.load %arg11[%c0_23, %c0_24] : memref<1x32xf32, #tpu.memory_space<vmem>>, vector<1x32xf32>
      %35 = vector.broadcast %34 : vector<1x32xf32> to vector<16x32xf32>
      %36 = arith.addf %33, %35 : vector<16x32xf32>
      %c0_25 = arith.constant 0 : index
      %c0_26 = arith.constant 0 : index
      %37 = vector.load %arg12[%c0_25, %c0_26] : memref<16x32xf32, #tpu.memory_space<vmem>>, vector<16x32xf32>
      tpu.vector_store %arg12[%c0_25, %c0_26], %36 {strides = array<i32>} : memref<16x32xf32, #tpu.memory_space<vmem>>, vector<16x32xf32>,
    } else {
    }
    return
  }
  func.func @transform_0(%arg0: i32, %arg1: i32) -> (i32, i32) {
    %c0_i32 = arith.constant 0 : i32
    %c0_i32_0 = arith.constant 0 : i32
    return %arg0, %c0_i32 : i32, i32
  }
  func.func @transform_1(%arg0: i32, %arg1: i32) -> (i32, i32) {
    %c0_i32 = arith.constant 0 : i32
    %c0_i32_0 = arith.constant 0 : i32
    return %arg0, %c0_i32 : i32, i32
  }
  func.func @transform_2(%arg0: i32, %arg1: i32) -> (i32, i32) {
    %c0_i32 = arith.constant 0 : i32
    %c0_i32_0 = arith.constant 0 : i32
    %c0_i32_1 = arith.constant 0 : i32
    return %c0_i32, %c0_i32_0 : i32, i32
  }
  func.func @transform_3(%arg0: i32, %arg1: i32) -> (i32, i32) {
    %c0_i32 = arith.constant 0 : i32
    %c0_i32_0 = arith.constant 0 : i32
    %c0_i32_1 = arith.constant 0 : i32
    return %c0_i32, %c0_i32_0 : i32, i32
  }
  func.func @transform_4(%arg0: i32, %arg1: i32) -> (i32, i32) {
    %c0_i32 = arith.constant 0 : i32
    %c0_i32_0 = arith.constant 0 : i32
    %c0_i32_1 = arith.constant 0 : i32
    return %c0_i32, %c0_i32_0 : i32, i32
  }
  func.func @transform_5(%arg0: i32, %arg1: i32) -> (i32, i32) {
    %c0_i32 = arith.constant 0 : i32
    %c0_i32_0 = arith.constant 0 : i32
    %c0_i32_1 = arith.constant 0 : i32
    return %c0_i32, %c0_i32_0 : i32, i32
  }
  func.func @transform_6(%arg0: i32, %arg1: i32) -> (i32, i32) {
    %c0_i32 = arith.constant 0 : i32
    %c0_i32_0 = arith.constant 0 : i32
    return %c0_i32, %arg1 : i32, i32
  }
  func.func @transform_7(%arg0: i32, %arg1: i32) -> (i32, i32) {
    %c0_i32 = arith.constant 0 : i32
    %c0_i32_0 = arith.constant 0 : i32
    return %c0_i32, %arg1 : i32, i32
  }
  func.func @transform_8(%arg0: i32, %arg1: i32) -> (i32, i32) {
    %c0_i32 = arith.constant 0 : i32
    %c0_i32_0 = arith.constant 0 : i32
    return %arg1, %c0_i32 : i32, i32
  }
  func.func @transform_9(%arg0: i32, %arg1: i32) -> (i32, i32) {
    %c0_i32 = arith.constant 0 : i32
    %c0_i32_0 = arith.constant 0 : i32
    %c0_i32_1 = arith.constant 0 : i32
    return %c0_i32, %c0_i32_0 : i32, i32
  }
  func.func @transform_10(%arg0: i32, %arg1: i32) -> (i32, i32) {
    %c0_i32 = arith.constant 0 : i32
    %c0_i32_0 = arith.constant 0 : i32
    return %arg0, %c0_i32 : i32, i32
  }
}

module attributes {stable_mosaic.version = 11 : i64} {
  func.func @_linear_kernel(%arg0: i32, %arg1: i32, %arg2: memref<16x32xbf16, #tpu.memory_space<vmem>>, %arg3: memref<32x128xbf16, #tpu.memory_space<vmem>>, %arg4: memref<1x128xf32, #tpu.memory_space<vmem>>, %arg5: memref<16x128xf32, #tpu.memory_space<vmem>>) attributes {dimension_semantics = [#tpu.dimension_semantics<parallel>, #tpu.dimension_semantics<parallel>], iteration_bounds = array<i64: 1, 1>, scalar_prefetch = 0 : i64, scratch_operands = 0 : i64, tpu.core_type = #tpu.core_type<tc>, window_params = [{transform_indices = @transform_0, window_bounds = array<i64: 16, 32>}, {transform_indices = @transform_1, window_bounds = array<i64: 32, 128>}, {transform_indices = @transform_2, window_bounds = array<i64: 1, 128>}, {transform_indices = @transform_3, window_bounds = array<i64: 16, 128>}]} {
    %c0 = arith.constant 0 : index
    %c0_0 = arith.constant 0 : index
    %0 = vector.load %arg2[%c0, %c0_0] : memref<16x32xbf16, #tpu.memory_space<vmem>>, vector<16x32xbf16>
    %c0_1 = arith.constant 0 : index
    %c0_2 = arith.constant 0 : index
    %1 = vector.load %arg3[%c0_1, %c0_2] : memref<32x128xbf16, #tpu.memory_space<vmem>>, vector<32x128xbf16>
    %cst = arith.constant dense<0.000000e+00> : vector<16x128xf32>
    %2 = tpu.matmul %0, %1, %cst {dimension_numbers = #tpu.dot_dimension_numbers<[1], [0], [0], [1], [0, 0, 1, 1], [], []>} : vector<16x32xbf16>, vector<32x128xbf16>, vector<16x128xf32> -> vector<16x128xf32>
    %c0_3 = arith.constant 0 : index
    %c0_4 = arith.constant 0 : index
    %3 = vector.load %arg4[%c0_3, %c0_4] : memref<1x128xf32, #tpu.memory_space<vmem>>, vector<1x128xf32>
    %4 = vector.broadcast %3 : vector<1x128xf32> to vector<16x128xf32>
    %5 = arith.addf %2, %4 : vector<16x128xf32>
    %c0_5 = arith.constant 0 : index
    %c0_6 = arith.constant 0 : index
    %6 = vector.load %arg5[%c0_5, %c0_6] : memref<16x128xf32, #tpu.memory_space<vmem>>, vector<16x128xf32>
    tpu.vector_store %arg5[%c0_5, %c0_6], %5 {strides = array<i32>} : memref<16x128xf32, #tpu.memory_space<vmem>>, vector<16x128xf32>,
    return
  }
  func.func @transform_0(%arg0: i32, %arg1: i32) -> (i32, i32) {
    %c0_i32 = arith.constant 0 : i32
    %c0_i32_0 = arith.constant 0 : i32
    return %arg0, %c0_i32 : i32, i32
  }
  func.func @transform_1(%arg0: i32, %arg1: i32) -> (i32, i32) {
    %c0_i32 = arith.constant 0 : i32
    %c0_i32_0 = arith.constant 0 : i32
    return %c0_i32, %arg1 : i32, i32
  }
  func.func @transform_2(%arg0: i32, %arg1: i32) -> (i32, i32) {
    %c0_i32 = arith.constant 0 : i32
    %c0_i32_0 = arith.constant 0 : i32
    return %c0_i32, %arg1 : i32, i32
  }
  func.func @transform_3(%arg0: i32, %arg1: i32) -> (i32, i32) {
    %c0_i32 = arith.constant 0 : i32
    return %arg0, %arg1 : i32, i32
  }
}

</mosaic_0001>

<llo_original>
// kernel: transformer_forward.13
$region0: #{transformer_forward.13}
  #allocation0 [shape = 'u32[]', space=smem, size = 0x4, offset = 0x4, fixed_abs, tag = 'smem constant byte address 0x4 - core index']
  #allocation1 [shape = 'u32[144,128]{1,0:T(1,128)}', space=vmem, size = 0x12000, scoped, tag = 'internal scratch']
  %s0 = inlined_call_operand.vmem [shape: bf16[16,32], index: 0, kind: input, shape index: {}]
  %s1 = inlined_call_operand.vmem [shape: bf16[32,128], index: 1, kind: input, shape index: {}]
  %s2 = inlined_call_operand.vmem [shape: f32[1,128], index: 2, kind: input, shape index: {}]
  %s3 = inlined_call_operand.vmem [shape: f32[16,128], index: 3, kind: output, shape index: {}]
  %s4 = sld [smem:[#allocation0]]
  $region22: #{transformer_forward.13} parent=0
    _
  %s6 = ssub.s32 1, %s4
  %s7 = scalar_select 0, %s6, %s4
  // Predicated region
  $region2: #{transformer_forward.13} parent=0 // pred_check
    _
  $region3: #{transformer_forward.13} parent=0 // pred_check_branch
    %9 = sbr.rel (0) target = $region5
  $region4: #{transformer_forward.13} parent=0 // pred_region
    _
  $region5: #{transformer_forward.13} parent=0 // pred_fallthru
    _
  // Predicated region
  $region6: #{transformer_forward.13} parent=0 // pred_check
    _
  $region7: #{transformer_forward.13} parent=0 // pred_check_branch
    %11 = sbr.rel (0) target = $region9
  $region8: #{transformer_forward.13} parent=0 // pred_region
    _
  $region9: #{transformer_forward.13} parent=0 // pred_fallthru
    _
  // Predicated region
  $region10: #{transformer_forward.13} parent=0 // pred_check
    _
  $region11: #{transformer_forward.13} parent=0 // pred_check_branch
    %13 = sbr.rel (0) target = $region13
  $region12: #{transformer_forward.13} parent=0 // pred_region
    _
  $region13: #{transformer_forward.13} parent=0 // pred_fallthru
    _
  %v15 = vld [vmem:[%s0] sm:$0xf]
  %v16 = vld [vmem:[%s0 + $0x4] sm:$0xf]
  %v17 = vld [vmem:[%s1] sm:$0xf]
  %v18 = vld [vmem:[%s1 + $0x4] sm:$0xf]
  %v19 = vld [vmem:[%s1 + $0x8] sm:$0xf]
  %v20 = vld [vmem:[%s1 + $0xc] sm:$0xf]
  %v21 = vld [vmem:[%s2] sm:$0x1]
  %v23 = vlaneseq
  %v24 = vshrl.u32 %v23, 7
  %v25 = vsub.s32 0, %v24
  %v26 = vrot.slane %v21, %v25
  %v30 = vunpack.c.l.b16 %v15
  %v31 = vunpack.c.l.b16 %v16
  %v32 = vpack.c.b16 %v31, %v30
  %v37 = vunpack.c.l.b16 %v17
  %v38 = vunpack.c.l.b16 %v18
  %v39 = vunpack.c.l.b16 %v19
  %v40 = vunpack.c.l.b16 %v20
  %v41 = vpack.c.b16 %v38, %v37
  %v42 = vpack.c.b16 %v40, %v39
  %vm45 = vcmask 261120
  %v47 = vsel %vm45, %v32, 0
  %49 = vmatprep.subr.bf16.mxu0 0
  %50 = vmatpush1.bf16.msra.mxu0 0
  %51 = vmatprep.subr.bf16.mxu0 0
  %52 = vmatpush1.bf16.msra.mxu0 0
  %53 = vmatprep.subr.bf16.mxu0 0
  %54 = vmatpush1.bf16.msra.mxu0 0
  %55 = vmatprep.subr.bf16.mxu0 0
  %56 = vmatpush1.bf16.msra.mxu0 0
  %57 = vmatprep.subr.bf16.mxu0 0
  %58 = vmatpush1.bf16.msra.mxu0 0
  %59 = vmatprep.subr.bf16.mxu0 0
  %60 = vmatpush1.bf16.msra.mxu0 0
  %61 = vmatprep.subr.bf16.mxu0 0
  %62 = vmatpush1.bf16.msra.mxu0 %v42
  %63 = vmatprep.subr.bf16.mxu0 0
  %64 = vmatpush1.bf16.msra.mxu0 %v41
  %65 = vmatprep.subr.bf16.mxu0 0
  %66 = vmatpush2.bf16.msra.mxu0 0
  %67 = vmatprep.subr.bf16.mxu0 0
  %68 = vmatpush2.bf16.msra.mxu0 0
  %69 = vmatprep.subr.bf16.mxu0 0
  %70 = vmatpush2.bf16.msra.mxu0 0
  %71 = vmatprep.subr.bf16.mxu0 0
  %72 = vmatpush2.bf16.msra.mxu0 0
  %73 = vmatprep.subr.bf16.mxu0 0
  %74 = vmatpush2.bf16.msra.mxu0 0
  %75 = vmatprep.subr.bf16.mxu0 0
  %76 = vmatpush2.bf16.msra.mxu0 0
  %77 = vmatprep.subr.bf16.mxu0 0
  %78 = vmatpush2.bf16.msra.mxu0 0
  %79 = vmatprep.subr.bf16.mxu0 0
  %80 = vmatpush2.bf16.msra.mxu0 0
  %81 = vmatprep.mubr.bf16.mxu0 0
  %82 = vmatmul.mubr.bf16.gmra.mxu0 %v47
  %v83 = vpop.f32.mrf.mxu0
  %v84 = vadd.f32 %v26, %v83
  %v85 = vpop.f32.mrf.mxu0
  %v86 = vpop.f32.mrf.mxu0
  %v87 = vadd.f32 %v26, %v86
  %v88 = vpop.f32.mrf.mxu0
  %89 = vdwg.mxu0
  %90 = vst [vmem:[%s3] sm:$0xff] %v84
  %91 = vst [vmem:[%s3 + $0x8] sm:$0xff] %v87
  // Predicated region
  $region14: #{transformer_forward.13} parent=0 // pred_check
    _
  $region15: #{transformer_forward.13} parent=0 // pred_check_branch
    %93 = sbr.rel (0) target = $region17
  $region16: #{transformer_forward.13} parent=0 // pred_region
    _
  $region17: #{transformer_forward.13} parent=0 // pred_fallthru
    _
  // Predicated region
  $region18: #{transformer_forward.13} parent=0 // pred_check
    _
  $region19: #{transformer_forward.13} parent=0 // pred_check_branch
    %95 = sbr.rel (0) target = $region21
  $region20: #{transformer_forward.13} parent=0 // pred_region
    _
  $region21: #{transformer_forward.13} parent=0 // pred_fallthru
    _

// kernel: transformer_forward.7
$region0: #{transformer_forward.7}
  #allocation0 [shape = 'u32[]', space=smem, size = 0x4, offset = 0x4, fixed_abs, tag = 'smem constant byte address 0x4 - core index']
  #allocation1 [shape = 'u32[144,128]{1,0:T(1,128)}', space=vmem, size = 0x12000, scoped, tag = 'internal scratch']
  %s0 = inlined_call_operand.vmem [shape: f32[16,32], index: 0, kind: input, shape index: {}]
  %s1 = inlined_call_operand.vmem [shape: f32[1,32], index: 1, kind: input, shape index: {}]
  %s2 = inlined_call_operand.vmem [shape: f32[1,32], index: 2, kind: input, shape index: {}]
  %s3 = inlined_call_operand.vmem [shape: bf16[32,96], index: 3, kind: input, shape index: {}]
  %s4 = inlined_call_operand.vmem [shape: f32[1,96], index: 4, kind: input, shape index: {}]
  %s5 = inlined_call_operand.vmem [shape: bf16[16,96], index: 5, kind: output, shape index: {}]
  %s6 = sld [smem:[#allocation0]]
  $region30: #{transformer_forward.7} parent=0
    _
  %s8 = ssub.s32 1, %s6
  %s9 = scalar_select 0, %s8, %s6
  // Predicated region
  $region2: #{transformer_forward.7} parent=0 // pred_check
    _
  $region3: #{transformer_forward.7} parent=0 // pred_check_branch
    %11 = sbr.rel (0) target = $region5
  $region4: #{transformer_forward.7} parent=0 // pred_region
    _
  $region5: #{transformer_forward.7} parent=0 // pred_fallthru
    _
  // Predicated region
  $region6: #{transformer_forward.7} parent=0 // pred_check
    _
  $region7: #{transformer_forward.7} parent=0 // pred_check_branch
    %13 = sbr.rel (0) target = $region9
  $region8: #{transformer_forward.7} parent=0 // pred_region
    _
  $region9: #{transformer_forward.7} parent=0 // pred_fallthru
    _
  // Predicated region
  $region10: #{transformer_forward.7} parent=0 // pred_check
    _
  $region11: #{transformer_forward.7} parent=0 // pred_check_branch
    %15 = sbr.rel (0) target = $region13
  $region12: #{transformer_forward.7} parent=0 // pred_region
    _
  $region13: #{transformer_forward.7} parent=0 // pred_fallthru
    _
  // Predicated region
  $region14: #{transformer_forward.7} parent=0 // pred_check
    _
  $region15: #{transformer_forward.7} parent=0 // pred_check_branch
    %17 = sbr.rel (0) target = $region17
  $region16: #{transformer_forward.7} parent=0 // pred_region
    _
  $region17: #{transformer_forward.7} parent=0 // pred_fallthru
    _
  // Predicated region
  $region18: #{transformer_forward.7} parent=0 // pred_check
    _
  $region19: #{transformer_forward.7} parent=0 // pred_check_branch
    %19 = sbr.rel (0) target = $region21
  $region20: #{transformer_forward.7} parent=0 // pred_region
    _
  $region21: #{transformer_forward.7} parent=0 // pred_fallthru
    _
  %v21 = vld [vmem:[%s0] sm:$0xff]
  %v22 = vld [vmem:[%s0 + $0x8] sm:$0xff]
  %v23 = vld [vmem:[%s1] sm:$0x1]
  %v24 = vld [vmem:[%s2] sm:$0x1]
  %vm25 = vcmask 261120
  %v26 = vsel %vm25, %v21, 0.0
  %27 = vadd.xlane.f32.xlu0 %v26
  %v28 = vpop.xlane.xlu0 %27
  %v29 = vsel %vm25, %v22, 0.0
  %30 = vadd.xlane.f32.xlu0 %v29
  %v31 = vpop.xlane.xlu0 %30
  %v32 = vrcp.pop 32.0
  %v33 = vmul.f32 %v28, %v32
  %v34 = vmul.f32 %v31, %v32
  %v35 = vsub.f32 %v21, %v33
  %v36 = vsub.f32 %v22, %v34
  %v37 = vmul.f32 %v35, %v35
  %v38 = vmul.f32 %v36, %v36
  %v39 = vsel %vm25, %v37, 0.0
  %40 = vadd.xlane.f32.xlu0 %v39
  %v41 = vpop.xlane.xlu0 %40
  %v42 = vsel %vm25, %v38, 0.0
  %43 = vadd.xlane.f32.xlu0 %v42
  %v44 = vpop.xlane.xlu0 %43
  %v45 = vmul.f32 %v41, %v32
  %v46 = vmul.f32 %v44, %v32
  %v47 = vadd.f32 %v45, 1e-05
  %v48 = vadd.f32 %v46, 1e-05
  %v49 = vrsqrt.pop %v47
  %v50 = vrsqrt.pop %v48
  %v51 = vmul.f32 %v35, %v49
  %v52 = vmul.f32 %v36, %v50
  %v54 = vlaneseq
  %v55 = vshrl.u32 %v54, 7
  %v56 = vsub.s32 0, %v55
  %v57 = vrot.slane %v23, %v56
  %v59 = vmul.f32 %v51, %v57
  %v60 = vmul.f32 %v52, %v57
  %v62 = vlaneseq
  %v63 = vshrl.u32 %v62, 7
  %v64 = vsub.s32 0, %v63
  %v65 = vrot.slane %v24, %v64
  %v67 = vadd.f32 %v59, %v65
  %v68 = vadd.f32 %v60, %v65
  %v69 = vpack.c.bf16 %v68, %v67
  %v70 = vld [vmem:[%s3] sm:$0xf]
  %v71 = vld [vmem:[%s3 + $0x4] sm:$0xf]
  %v72 = vld [vmem:[%s3 + $0x8] sm:$0xf]
  %v73 = vld [vmem:[%s3 + $0xc] sm:$0xf]
  %v74 = vld [vmem:[%s4] sm:$0x1]
  %v76 = vlaneseq
  %v77 = vshrl.u32 %v76, 7
  %v78 = vsub.s32 0, %v77
  %v79 = vrot.slane %v74, %v78
  %v85 = vunpack.c.l.b16 %v70
  %v86 = vunpack.c.l.b16 %v71
  %v87 = vunpack.c.l.b16 %v72
  %v88 = vunpack.c.l.b16 %v73
  %v89 = vpack.c.b16 %v86, %v85
  %v90 = vpack.c.b16 %v88, %v87
  %v94 = vsel %vm25, %v69, 0
  %96 = vmatprep.subr.bf16.mxu0 0
  %97 = vmatpush1.bf16.msra.mxu0 0
  %98 = vmatprep.subr.bf16.mxu0 0
  %99 = vmatpush1.bf16.msra.mxu0 0
  %100 = vmatprep.subr.bf16.mxu0 0
  %101 = vmatpush1.bf16.msra.mxu0 0
  %102 = vmatprep.subr.bf16.mxu0 0
  %103 = vmatpush1.bf16.msra.mxu0 0
  %104 = vmatprep.subr.bf16.mxu0 0
  %105 = vmatpush1.bf16.msra.mxu0 0
  %106 = vmatprep.subr.bf16.mxu0 0
  %107 = vmatpush1.bf16.msra.mxu0 0
  %108 = vmatprep.subr.bf16.mxu0 0
  %109 = vmatpush1.bf16.msra.mxu0 %v90
  %110 = vmatprep.subr.bf16.mxu0 0
  %111 = vmatpush1.bf16.msra.mxu0 %v89
  %112 = vmatprep.subr.bf16.mxu0 0
  %113 = vmatpush2.bf16.msra.mxu0 0
  %114 = vmatprep.subr.bf16.mxu0 0
  %115 = vmatpush2.bf16.msra.mxu0 0
  %116 = vmatprep.subr.bf16.mxu0 0
  %117 = vmatpush2.bf16.msra.mxu0 0
  %118 = vmatprep.subr.bf16.mxu0 0
  %119 = vmatpush2.bf16.msra.mxu0 0
  %120 = vmatprep.subr.bf16.mxu0 0
  %121 = vmatpush2.bf16.msra.mxu0 0
  %122 = vmatprep.subr.bf16.mxu0 0
  %123 = vmatpush2.bf16.msra.mxu0 0
  %124 = vmatprep.subr.bf16.mxu0 0
  %125 = vmatpush2.bf16.msra.mxu0 0
  %126 = vmatprep.subr.bf16.mxu0 0
  %127 = vmatpush2.bf16.msra.mxu0 0
  %128 = vmatprep.mubr.bf16.mxu0 0
  %129 = vmatmul.mubr.bf16.gmra.mxu0 %v94
  %v130 = vpop.f32.mrf.mxu0
  %v131 = vadd.f32 %v79, %v130
  %v132 = vpop.f32.mrf.mxu0
  %v133 = vpop.f32.mrf.mxu0
  %v134 = vadd.f32 %v79, %v133
  %v135 = vpop.f32.mrf.mxu0
  %136 = vdwg.mxu0
  %v137 = vpack.c.bf16 %v134, %v131
  %v139 = vunpack.c.l.b16 %v137
  %v140 = vunpack.c.h.b16 %v137
  %v141 = vpack.c.b16 %v139, %v139
  %v142 = vpack.c.b16 %v140, %v140
  %vm145 = vcmask 781312
  %146 = vst.msk [vmem:[%s5] sm:$0xf] %vm145, %v141
  %147 = vst.msk [vmem:[%s5 + $0x4] sm:$0xf] %vm145, %v142
  // Predicated region
  $region22: #{transformer_forward.7} parent=0 // pred_check
    _
  $region23: #{transformer_forward.7} parent=0 // pred_check_branch
    %149 = sbr.rel (0) target = $region25
  $region24: #{transformer_forward.7} parent=0 // pred_region
    _
  $region25: #{transformer_forward.7} parent=0 // pred_fallthru
    _
  // Predicated region
  $region26: #{transformer_forward.7} parent=0 // pred_check
    _
  $region27: #{transformer_forward.7} parent=0 // pred_check_branch
    %151 = sbr.rel (0) target = $region29
  $region28: #{transformer_forward.7} parent=0 // pred_region
    _
  $region29: #{transformer_forward.7} parent=0 // pred_fallthru
    _

// kernel: transformer_forward.9
$region0: #{transformer_forward.9}
  #allocation0 [shape = 'u32[]', space=smem, size = 0x4, offset = 0x4, fixed_abs, tag = 'smem constant byte address 0x4 - core index']
  #allocation1 [shape = 'u32[144,128]{1,0:T(1,128)}', space=vmem, size = 0x12000, scoped, tag = 'internal scratch']
  #allocation2 [shape = 'f32[16,32]{1,0:T(8,128)}', space=vmem, size = 0x2000, scoped, tag = 'scratch operand']
  #allocation3 [shape = 'bf16[16,32]{1,0:T(8,128)(2,1)}', space=vmem, size = 0x1000, scoped, tag = 'scratch operand']
  #allocation4 [shape = 'f32[16,32]{1,0:T(8,128)}', space=vmem, size = 0x2000, scoped, tag = 'scratch operand']
  %s0 = inlined_call_operand.vmem [shape: f32[16,32], index: 0, kind: input, shape index: {}]
  %s1 = inlined_call_operand.vmem [shape: bf16[16,32], index: 1, kind: input, shape index: {}]
  %s2 = inlined_call_operand.vmem [shape: bf16[32,32], index: 2, kind: input, shape index: {}]
  %s3 = inlined_call_operand.vmem [shape: f32[1,32], index: 3, kind: input, shape index: {}]
  %s4 = inlined_call_operand.vmem [shape: f32[1,32], index: 4, kind: input, shape index: {}]
  %s5 = inlined_call_operand.vmem [shape: f32[1,32], index: 5, kind: input, shape index: {}]
  %s6 = inlined_call_operand.vmem [shape: bf16[32,128], index: 6, kind: input, shape index: {}]
  %s7 = inlined_call_operand.vmem [shape: f32[1,128], index: 7, kind: input, shape index: {}]
  %s8 = inlined_call_operand.vmem [shape: bf16[128,32], index: 8, kind: input, shape index: {}]
  %s9 = inlined_call_operand.vmem [shape: f32[1,32], index: 9, kind: input, shape index: {}]
  %s10 = inlined_call_operand.vmem [shape: f32[16,32], index: 10, kind: output, shape index: {}]
  %s11 = sld [smem:[#allocation0]]
  $region58: #{transformer_forward.9} parent=0
    _
  %s13 = ssub.s32 1, %s11
  %s14 = scalar_select 0, %s13, %s11
  // Predicated region
  $region2: #{transformer_forward.9} parent=0 // pred_check
    _
  $region3: #{transformer_forward.9} parent=0 // pred_check_branch
    %16 = sbr.rel (0) target = $region5
  $region4: #{transformer_forward.9} parent=0 // pred_region
    _
  $region5: #{transformer_forward.9} parent=0 // pred_fallthru
    _
  // Predicated region
  $region6: #{transformer_forward.9} parent=0 // pred_check
    _
  $region7: #{transformer_forward.9} parent=0 // pred_check_branch
    %18 = sbr.rel (0) target = $region9
  $region8: #{transformer_forward.9} parent=0 // pred_region
    _
  $region9: #{transformer_forward.9} parent=0 // pred_fallthru
    _
  // Predicated region
  $region10: #{transformer_forward.9} parent=0 // pred_check
    _
  $region11: #{transformer_forward.9} parent=0 // pred_check_branch
    %20 = sbr.rel (0) target = $region13
  $region12: #{transformer_forward.9} parent=0 // pred_region
    _
  $region13: #{transformer_forward.9} parent=0 // pred_fallthru
    _
  // Predicated region
  $region14: #{transformer_forward.9} parent=0 // pred_check
    _
  $region15: #{transformer_forward.9} parent=0 // pred_check_branch
    %22 = sbr.rel (0) target = $region17
  $region16: #{transformer_forward.9} parent=0 // pred_region
    _
  $region17: #{transformer_forward.9} parent=0 // pred_fallthru
    _
  // Predicated region
  $region18: #{transformer_forward.9} parent=0 // pred_check
    _
  $region19: #{transformer_forward.9} parent=0 // pred_check_branch
    %24 = sbr.rel (0) target = $region21
  $region20: #{transformer_forward.9} parent=0 // pred_region
    _
  $region21: #{transformer_forward.9} parent=0 // pred_fallthru
    _
  // Predicated region
  $region22: #{transformer_forward.9} parent=0 // pred_check
    _
  $region23: #{transformer_forward.9} parent=0 // pred_check_branch
    %26 = sbr.rel (0) target = $region25
  $region24: #{transformer_forward.9} parent=0 // pred_region
    _
  $region25: #{transformer_forward.9} parent=0 // pred_fallthru
    _
  // Predicated region
  $region26: #{transformer_forward.9} parent=0 // pred_check
    _
  $region27: #{transformer_forward.9} parent=0 // pred_check_branch
    %28 = sbr.rel (0) target = $region29
  $region28: #{transformer_forward.9} parent=0 // pred_region
    _
  $region29: #{transformer_forward.9} parent=0 // pred_fallthru
    _
  // Predicated region
  $region30: #{transformer_forward.9} parent=0 // pred_check
    _
  $region31: #{transformer_forward.9} parent=0 // pred_check_branch
    %30 = sbr.rel (0) target = $region33
  $region32: #{transformer_forward.9} parent=0 // pred_region
    _
  $region33: #{transformer_forward.9} parent=0 // pred_fallthru
    _
  // Predicated region
  $region34: #{transformer_forward.9} parent=0 // pred_check
    _
  $region35: #{transformer_forward.9} parent=0 // pred_check_branch
    %32 = sbr.rel (0) target = $region37
  $region36: #{transformer_forward.9} parent=0 // pred_region
    _
  $region37: #{transformer_forward.9} parent=0 // pred_fallthru
    _
  // Predicated region
  $region38: #{transformer_forward.9} parent=0 // pred_check
    _
  $region39: #{transformer_forward.9} parent=0 // pred_check_branch
    %34 = sbr.rel (0) target = $region41
  $region40: #{transformer_forward.9} parent=0 // pred_region
    _
  $region41: #{transformer_forward.9} parent=0 // pred_fallthru
    _
  %p36 = scmp.eq.s32.totalorder 0, 0
  // Predicated region
  $region42: #{transformer_forward.9} parent=0 // pred_check
    %p37 = pneg %p36
  $region43: #{transformer_forward.9} parent=0 // pred_check_branch
    %39 = sbr.rel (%p37) target = $region45
  $region44: #{transformer_forward.9} parent=0 // pred_region
    %v40 = vld [vmem:[%s0] sm:$0xff]
    %v41 = vld [vmem:[%s0 + $0x8] sm:$0xff]
    %v42 = vld [vmem:[%s1] sm:$0xf]
    %v43 = vld [vmem:[%s1 + $0x4] sm:$0xf]
    %v44 = vld [vmem:[%s2] sm:$0xf]
    %v45 = vld [vmem:[%s2 + $0x4] sm:$0xf]
    %v46 = vld [vmem:[%s2 + $0x8] sm:$0xf]
    %v47 = vld [vmem:[%s2 + $0xc] sm:$0xf]
    %v48 = vld [vmem:[%s3] sm:$0x1]
    %v50 = vlaneseq
    %v51 = vshrl.u32 %v50, 7
    %v52 = vsub.s32 0, %v51
    %v53 = vrot.slane %v48, %v52
    %v57 = vunpack.c.l.b16 %v42
    %v58 = vunpack.c.l.b16 %v43
    %v59 = vpack.c.b16 %v58, %v57
    %v64 = vunpack.c.l.b16 %v44
    %v65 = vunpack.c.l.b16 %v45
    %v66 = vunpack.c.l.b16 %v46
    %v67 = vunpack.c.l.b16 %v47
    %v68 = vpack.c.b16 %v65, %v64
    %v69 = vpack.c.b16 %v67, %v66
    %vm72 = vcmask 261120
    %v74 = vsel %vm72, %v59, 0
    %76 = vmatprep.subr.bf16.mxu0 0
    %77 = vmatpush1.bf16.msra.mxu0 0
    %78 = vmatprep.subr.bf16.mxu0 0
    %79 = vmatpush1.bf16.msra.mxu0 0
    %80 = vmatprep.subr.bf16.mxu0 0
    %81 = vmatpush1.bf16.msra.mxu0 0
    %82 = vmatprep.subr.bf16.mxu0 0
    %83 = vmatpush1.bf16.msra.mxu0 0
    %84 = vmatprep.subr.bf16.mxu0 0
    %85 = vmatpush1.bf16.msra.mxu0 0
    %86 = vmatprep.subr.bf16.mxu0 0
    %87 = vmatpush1.bf16.msra.mxu0 0
    %88 = vmatprep.subr.bf16.mxu0 0
    %89 = vmatpush1.bf16.msra.mxu0 %v69
    %90 = vmatprep.subr.bf16.mxu0 0
    %91 = vmatpush1.bf16.msra.mxu0 %v68
    %92 = vmatprep.subr.bf16.mxu0 0
    %93 = vmatpush2.bf16.msra.mxu0 0
    %94 = vmatprep.subr.bf16.mxu0 0
    %95 = vmatpush2.bf16.msra.mxu0 0
    %96 = vmatprep.subr.bf16.mxu0 0
    %97 = vmatpush2.bf16.msra.mxu0 0
    %98 = vmatprep.subr.bf16.mxu0 0
    %99 = vmatpush2.bf16.msra.mxu0 0
    %100 = vmatprep.subr.bf16.mxu0 0
    %101 = vmatpush2.bf16.msra.mxu0 0
    %102 = vmatprep.subr.bf16.mxu0 0
    %103 = vmatpush2.bf16.msra.mxu0 0
    %104 = vmatprep.subr.bf16.mxu0 0
    %105 = vmatpush2.bf16.msra.mxu0 0
    %106 = vmatprep.subr.bf16.mxu0 0
    %107 = vmatpush2.bf16.msra.mxu0 0
    %108 = vmatprep.mubr.bf16.mxu0 0
    %109 = vmatmul.mubr.bf16.gmra.mxu0 %v74
    %v110 = vpop.f32.mrf.mxu0
    %v111 = vadd.f32 %v53, %v110
    %v112 = vpop.f32.mrf.mxu0
    %v113 = vpop.f32.mrf.mxu0
    %v114 = vadd.f32 %v53, %v113
    %v115 = vpop.f32.mrf.mxu0
    %116 = vdwg.mxu0
    %v117 = vadd.f32 %v40, %v111
    %v118 = vadd.f32 %v41, %v114
    %119 = vst.msk [vmem:[#allocation2] sm:$0xff] %vm72, %v117
    %120 = vst.msk [vmem:[#allocation2 + $0x8] sm:$0xff] %vm72, %v118
    %v121 = vld [vmem:[%s4] sm:$0x1]
    %v122 = vld [vmem:[%s5] sm:$0x1]
    %v123 = vsel %vm72, %v117, 0.0
    %124 = vadd.xlane.f32.xlu0 %v123
    %v125 = vpop.xlane.xlu0 %124
    %v126 = vsel %vm72, %v118, 0.0
    %127 = vadd.xlane.f32.xlu0 %v126
    %v128 = vpop.xlane.xlu0 %127
    %v129 = vrcp.pop 32.0
    %v130 = vmul.f32 %v125, %v129
    %v131 = vmul.f32 %v128, %v129
    %v132 = vsub.f32 %v117, %v130
    %v133 = vsub.f32 %v118, %v131
    %v134 = vmul.f32 %v132, %v132
    %v135 = vmul.f32 %v133, %v133
    %v136 = vsel %vm72, %v134, 0.0
    %137 = vadd.xlane.f32.xlu0 %v136
    %v138 = vpop.xlane.xlu0 %137
    %v139 = vsel %vm72, %v135, 0.0
    %140 = vadd.xlane.f32.xlu0 %v139
    %v141 = vpop.xlane.xlu0 %140
    %v142 = vmul.f32 %v138, %v129
    %v143 = vmul.f32 %v141, %v129
    %v144 = vadd.f32 %v142, 1e-05
    %v145 = vadd.f32 %v143, 1e-05
    %v146 = vrsqrt.pop %v144
    %v147 = vrsqrt.pop %v145
    %v148 = vmul.f32 %v132, %v146
    %v149 = vmul.f32 %v133, %v147
    %v151 = vlaneseq
    %v152 = vshrl.u32 %v151, 7
    %v153 = vsub.s32 0, %v152
    %v154 = vrot.slane %v121, %v153
    %v156 = vmul.f32 %v148, %v154
    %v157 = vmul.f32 %v149, %v154
    %v159 = vlaneseq
    %v160 = vshrl.u32 %v159, 7
    %v161 = vsub.s32 0, %v160
    %v162 = vrot.slane %v122, %v161
    %v164 = vadd.f32 %v156, %v162
    %v165 = vadd.f32 %v157, %v162
    %v166 = vpack.c.bf16 %v165, %v164
    %v168 = vunpack.c.l.b16 %v166
    %v169 = vunpack.c.h.b16 %v166
    %v170 = vpack.c.b16 %v168, %v168
    %v171 = vpack.c.b16 %v169, %v169
    %vm174 = vcmask 257024
    %175 = vst.msk [vmem:[#allocation3] sm:$0xf] %vm174, %v170
    %176 = vst.msk [vmem:[#allocation3 + $0x4] sm:$0xf] %vm174, %v171
    %177 = vst.msk [vmem:[#allocation4] sm:$0xff] %vm72, 0.0
    %178 = vst.msk [vmem:[#allocation4 + $0x8] sm:$0xff] %vm72, 0.0
  $region45: #{transformer_forward.9} parent=0 // pred_fallthru
    _
  %v179 = vld [vmem:[#allocation3] sm:$0xf]
  %v180 = vld [vmem:[#allocation3 + $0x4] sm:$0xf]
  %v181 = vld [vmem:[%s6] sm:$0xf]
  %v182 = vld [vmem:[%s6 + $0x4] sm:$0xf]
  %v183 = vld [vmem:[%s6 + $0x8] sm:$0xf]
  %v184 = vld [vmem:[%s6 + $0xc] sm:$0xf]
  %v185 = vld [vmem:[%s7] sm:$0x1]
  %v187 = vlaneseq
  %v188 = vshrl.u32 %v187, 7
  %v189 = vsub.s32 0, %v188
  %v190 = vrot.slane %v185, %v189
  %v194 = vunpack.c.l.b16 %v179
  %v195 = vunpack.c.l.b16 %v180
  %v196 = vpack.c.b16 %v195, %v194
  %v201 = vunpack.c.l.b16 %v181
  %v202 = vunpack.c.l.b16 %v182
  %v203 = vunpack.c.l.b16 %v183
  %v204 = vunpack.c.l.b16 %v184
  %v205 = vpack.c.b16 %v202, %v201
  %v206 = vpack.c.b16 %v204, %v203
  %vm209 = vcmask 261120
  %v211 = vsel %vm209, %v196, 0
  %213 = vmatprep.subr.bf16.mxu0 0
  %214 = vmatpush1.bf16.msra.mxu0 0
  %215 = vmatprep.subr.bf16.mxu0 0
  %216 = vmatpush1.bf16.msra.mxu0 0
  %217 = vmatprep.subr.bf16.mxu0 0
  %218 = vmatpush1.bf16.msra.mxu0 0
  %219 = vmatprep.subr.bf16.mxu0 0
  %220 = vmatpush1.bf16.msra.mxu0 0
  %221 = vmatprep.subr.bf16.mxu0 0
  %222 = vmatpush1.bf16.msra.mxu0 0
  %223 = vmatprep.subr.bf16.mxu0 0
  %224 = vmatpush1.bf16.msra.mxu0 0
  %225 = vmatprep.subr.bf16.mxu0 0
  %226 = vmatpush1.bf16.msra.mxu0 %v206
  %227 = vmatprep.subr.bf16.mxu0 0
  %228 = vmatpush1.bf16.msra.mxu0 %v205
  %229 = vmatprep.subr.bf16.mxu0 0
  %230 = vmatpush2.bf16.msra.mxu0 0
  %231 = vmatprep.subr.bf16.mxu0 0
  %232 = vmatpush2.bf16.msra.mxu0 0
  %233 = vmatprep.subr.bf16.mxu0 0
  %234 = vmatpush2.bf16.msra.mxu0 0
  %235 = vmatprep.subr.bf16.mxu0 0
  %236 = vmatpush2.bf16.msra.mxu0 0
  %237 = vmatprep.subr.bf16.mxu0 0
  %238 = vmatpush2.bf16.msra.mxu0 0
  %239 = vmatprep.subr.bf16.mxu0 0
  %240 = vmatpush2.bf16.msra.mxu0 0
  %241 = vmatprep.subr.bf16.mxu0 0
  %242 = vmatpush2.bf16.msra.mxu0 0
  %243 = vmatprep.subr.bf16.mxu0 0
  %244 = vmatpush2.bf16.msra.mxu0 0
  %245 = vmatprep.mubr.bf16.mxu0 0
  %246 = vmatmul.mubr.bf16.gmra.mxu0 %v211
  %v247 = vpop.f32.mrf.mxu0
  %v248 = vadd.f32 %v190, %v247
  %v249 = vpop.f32.mrf.mxu0
  %v250 = vpop.f32.mrf.mxu0
  %v251 = vadd.f32 %v190, %v250
  %v252 = vpop.f32.mrf.mxu0
  %253 = vdwg.mxu0
  %v254 = vmul.f32 %v248, 0.5
  %v255 = vmul.f32 %v251, 0.5
  %v256 = vmul.f32 %v248, 0.044715
  %v257 = vmul.f32 %v251, 0.044715
  %v258 = vmul.f32 %v256, %v248
  %v259 = vmul.f32 %v257, %v251
  %v260 = vmul.f32 %v258, %v248
  %v261 = vmul.f32 %v259, %v251
  %v262 = vadd.f32 %v248, %v260
  %v263 = vadd.f32 %v251, %v261
  %v264 = vmul.f32 %v262, 0.7978846
  %v265 = vmul.f32 %v263, 0.7978846
  %v266 = vtanh.pop %v264
  %v267 = vtanh.pop %v265
  %v268 = vadd.f32 %v266, 1.0
  %v269 = vadd.f32 %v267, 1.0
  %v270 = vmul.f32 %v254, %v268
  %v271 = vmul.f32 %v255, %v269
  %v272 = vld [vmem:[#allocation4] sm:$0xff]
  %v273 = vld [vmem:[#allocation4 + $0x8] sm:$0xff]
  %v274 = vpack.c.bf16 %v271, %v270
  %v275 = vld [vmem:[%s8] sm:$0xf]
  %v276 = vld [vmem:[%s8 + $0x4] sm:$0xf]
  %v277 = vld [vmem:[%s8 + $0x8] sm:$0xf]
  %v278 = vld [vmem:[%s8 + $0xc] sm:$0xf]
  %v279 = vld [vmem:[%s8 + $0x10] sm:$0xf]
  %v280 = vld [vmem:[%s8 + $0x14] sm:$0xf]
  %v281 = vld [vmem:[%s8 + $0x18] sm:$0xf]
  %v282 = vld [vmem:[%s8 + $0x1c] sm:$0xf]
  %v283 = vld [vmem:[%s8 + $0x20] sm:$0xf]
  %v284 = vld [vmem:[%s8 + $0x24] sm:$0xf]
  %v285 = vld [vmem:[%s8 + $0x28] sm:$0xf]
  %v286 = vld [vmem:[%s8 + $0x2c] sm:$0xf]
  %v287 = vld [vmem:[%s8 + $0x30] sm:$0xf]
  %v288 = vld [vmem:[%s8 + $0x34] sm:$0xf]
  %v289 = vld [vmem:[%s8 + $0x38] sm:$0xf]
  %v290 = vld [vmem:[%s8 + $0x3c] sm:$0xf]
  %v307 = vunpack.c.l.b16 %v275
  %v308 = vunpack.c.l.b16 %v276
  %v309 = vunpack.c.l.b16 %v277
  %v310 = vunpack.c.l.b16 %v278
  %v311 = vunpack.c.l.b16 %v279
  %v312 = vunpack.c.l.b16 %v280
  %v313 = vunpack.c.l.b16 %v281
  %v314 = vunpack.c.l.b16 %v282
  %v315 = vunpack.c.l.b16 %v283
  %v316 = vunpack.c.l.b16 %v284
  %v317 = vunpack.c.l.b16 %v285
  %v318 = vunpack.c.l.b16 %v286
  %v319 = vunpack.c.l.b16 %v287
  %v320 = vunpack.c.l.b16 %v288
  %v321 = vunpack.c.l.b16 %v289
  %v322 = vunpack.c.l.b16 %v290
  %v323 = vpack.c.b16 %v308, %v307
  %v324 = vpack.c.b16 %v310, %v309
  %v325 = vpack.c.b16 %v312, %v311
  %v326 = vpack.c.b16 %v314, %v313
  %v327 = vpack.c.b16 %v316, %v315
  %v328 = vpack.c.b16 %v318, %v317
  %v329 = vpack.c.b16 %v320, %v319
  %v330 = vpack.c.b16 %v322, %v321
  %339 = vmatprep.subr.bf16.mxu0 0
  %340 = vmatpush1.bf16.msra.mxu0 %v330
  %341 = vmatprep.subr.bf16.mxu0 0
  %342 = vmatpush1.bf16.msra.mxu0 %v329
  %343 = vmatprep.subr.bf16.mxu0 0
  %344 = vmatpush1.bf16.msra.mxu0 %v328
  %345 = vmatprep.subr.bf16.mxu0 0
  %346 = vmatpush1.bf16.msra.mxu0 %v327
  %347 = vmatprep.subr.bf16.mxu0 0
  %348 = vmatpush1.bf16.msra.mxu0 %v326
  %349 = vmatprep.subr.bf16.mxu0 0
  %350 = vmatpush1.bf16.msra.mxu0 %v325
  %351 = vmatprep.subr.bf16.mxu0 0
  %352 = vmatpush1.bf16.msra.mxu0 %v324
  %353 = vmatprep.subr.bf16.mxu0 0
  %354 = vmatpush1.bf16.msra.mxu0 %v323
  %355 = vmatprep.subr.bf16.mxu0 0
  %356 = vmatpush2.bf16.msra.mxu0 0
  %357 = vmatprep.subr.bf16.mxu0 0
  %358 = vmatpush2.bf16.msra.mxu0 0
  %359 = vmatprep.subr.bf16.mxu0 0
  %360 = vmatpush2.bf16.msra.mxu0 0
  %361 = vmatprep.subr.bf16.mxu0 0
  %362 = vmatpush2.bf16.msra.mxu0 0
  %363 = vmatprep.subr.bf16.mxu0 0
  %364 = vmatpush2.bf16.msra.mxu0 0
  %365 = vmatprep.subr.bf16.mxu0 0
  %366 = vmatpush2.bf16.msra.mxu0 0
  %367 = vmatprep.subr.bf16.mxu0 0
  %368 = vmatpush2.bf16.msra.mxu0 0
  %369 = vmatprep.subr.bf16.mxu0 0
  %370 = vmatpush2.bf16.msra.mxu0 0
  %371 = vmatprep.mubr.bf16.mxu0 0
  %372 = vmatmul.mubr.bf16.gmra.mxu0 %v274
  %v373 = vpop.f32.mrf.mxu0
  %v374 = vadd.f32 0.0, %v373
  %v375 = vpop.f32.mrf.mxu0
  %v376 = vpop.f32.mrf.mxu0
  %v377 = vadd.f32 0.0, %v376
  %v378 = vpop.f32.mrf.mxu0
  %379 = vdwg.mxu0
  %v380 = vadd.f32 %v272, %v374
  %v381 = vadd.f32 %v273, %v377
  %382 = vst.msk [vmem:[#allocation4] sm:$0xff] %vm209, %v380
  %383 = vst.msk [vmem:[#allocation4 + $0x8] sm:$0xff] %vm209, %v381
  // Predicated region
  $region46: #{transformer_forward.9} parent=0 // pred_check
    %p384 = pneg %p36
  $region47: #{transformer_forward.9} parent=0 // pred_check_branch
    %386 = sbr.rel (%p384) target = $region49
  $region48: #{transformer_forward.9} parent=0 // pred_region
    %v387 = vld [vmem:[#allocation2] sm:$0xff]
    %v388 = vld [vmem:[#allocation2 + $0x8] sm:$0xff]
    %v389 = vld [vmem:[#allocation4] sm:$0xff]
    %v390 = vld [vmem:[#allocation4 + $0x8] sm:$0xff]
    %v391 = vadd.f32 %v387, %v389
    %v392 = vadd.f32 %v388, %v390
    %v393 = vld [vmem:[%s9] sm:$0x1]
    %v395 = vlaneseq
    %v396 = vshrl.u32 %v395, 7
    %v397 = vsub.s32 0, %v396
    %v398 = vrot.slane %v393, %v397
    %v400 = vadd.f32 %v391, %v398
    %v401 = vadd.f32 %v392, %v398
    %402 = vst.msk [vmem:[%s10] sm:$0xff] %vm209, %v400
    %403 = vst.msk [vmem:[%s10 + $0x8] sm:$0xff] %vm209, %v401
  $region49: #{transformer_forward.9} parent=0 // pred_fallthru
    _
  // Predicated region
  $region50: #{transformer_forward.9} parent=0 // pred_check
    _
  $region51: #{transformer_forward.9} parent=0 // pred_check_branch
    %405 = sbr.rel (0) target = $region53
  $region52: #{transformer_forward.9} parent=0 // pred_region
    _
  $region53: #{transformer_forward.9} parent=0 // pred_fallthru
    _
  // Predicated region
  $region54: #{transformer_forward.9} parent=0 // pred_check
    _
  $region55: #{transformer_forward.9} parent=0 // pred_check_branch
    %407 = sbr.rel (0) target = $region57
  $region56: #{transformer_forward.9} parent=0 // pred_region
    _
  $region57: #{transformer_forward.9} parent=0 // pred_fallthru
    _

// kernel: transformer_forward.8
$region0: #{transformer_forward.8}
  #allocation0 [shape = 'u32[]', space=smem, size = 0x4, offset = 0x4, fixed_abs, tag = 'smem constant byte address 0x4 - core index']
  #allocation1 [shape = 'u32[144,128]{1,0:T(1,128)}', space=vmem, size = 0x12000, scoped, tag = 'internal scratch']
  #allocation2 [shape = 'f32[4,8,1]{2,1,0:T(8,128)}', space=vmem, size = 0x4000, scoped, tag = 'scratch operand']
  #allocation3 [shape = 'f32[4,8,1]{2,1,0:T(8,128)}', space=vmem, size = 0x4000, scoped, tag = 'scratch operand']
  #allocation4 [shape = 'f32[4,8,16]{2,1,0:T(8,128)}', space=vmem, size = 0x4000, scoped, tag = 'scratch operand']
  #allocation5 [shape = 's32[1]{0}', space=sflag, size = 0x4, scoped, tag = 'scoped memory for transformer_forward.8']
  #allocation6 [shape = 's32[1]{0:T(128)S(6)}', space=smem, size = 0x200, scoped, tag = 'prefetched SMEM operand 0']
  #allocation7 [shape = 's32[1]{0:T(128)S(6)}', space=smem, size = 0x200, scoped, tag = 'prefetched SMEM operand 1']
  %s0 = inlined_call_operand.<no memory space> [shape: s32[1], index: 0, kind: input, shape index: {}, may-alias: {0,1}]
  %s1 = inlined_call_operand.<no memory space> [shape: s32[1], index: 1, kind: input, shape index: {}, may-alias: {0,1}]
  %s2 = inlined_call_operand.vmem [shape: bf16[4,8,16], index: 2, kind: input, shape index: {}]
  %s3 = inlined_call_operand.vmem [shape: bf16[4,8,16], index: 3, kind: input, shape index: {}]
  %s4 = inlined_call_operand.vmem [shape: bf16[4,8,16], index: 4, kind: input, shape index: {}]
  %s5 = inlined_call_operand.vmem [shape: bf16[4,8,16], index: 5, kind: output, shape index: {}]
  %s6 = sld [smem:[#allocation0]]
  $region30: #{transformer_forward.8} parent=0
    _
  %s8 = ssub.s32 1, %s6
  %s9 = scalar_select 0, %s8, %s6
  %10 = sst [smem:[#allocation6]] %s0
  %11 = sst [smem:[#allocation7]] %s1
  // Predicated region
  $region2: #{transformer_forward.8} parent=0 // pred_check
    _
  $region3: #{transformer_forward.8} parent=0 // pred_check_branch
    %13 = sbr.rel (0) target = $region5
  $region4: #{transformer_forward.8} parent=0 // pred_region
    %s14 = sld [smem:[#allocation6]]
    %p15 = scmp.lt.s32.totalorder %s14, 0
    %s16 = scalar_select %p15, %s14, 0
    %s17 = smul.addr %s16, 4
    %s18 = scalar_lea.vmem %s2, %s17
    %s19 = sld [smem:[#allocation6]]
  $region5: #{transformer_forward.8} parent=0 // pred_fallthru
    _
  // Predicated region
  $region6: #{transformer_forward.8} parent=0 // pred_check
    _
  $region7: #{transformer_forward.8} parent=0 // pred_check_branch
    %21 = sbr.rel (0) target = $region9
  $region8: #{transformer_forward.8} parent=0 // pred_region
    %s22 = sld [smem:[#allocation7]]
    %p23 = scmp.lt.s32.totalorder %s22, 0
    %s24 = scalar_select %p23, %s22, 0
    %s25 = smul.addr %s24, 4
    %s26 = scalar_lea.vmem %s3, %s25
    %s27 = sld [smem:[#allocation7]]
  $region9: #{transformer_forward.8} parent=0 // pred_fallthru
    _
  // Predicated region
  $region10: #{transformer_forward.8} parent=0 // pred_check
    _
  $region11: #{transformer_forward.8} parent=0 // pred_check_branch
    %29 = sbr.rel (0) target = $region13
  $region12: #{transformer_forward.8} parent=0 // pred_region
    %s30 = sld [smem:[#allocation7]]
    %p31 = scmp.lt.s32.totalorder %s30, 0
    %s32 = scalar_select %p31, %s30, 0
    %s33 = smul.addr %s32, 4
    %s34 = scalar_lea.vmem %s4, %s33
    %s35 = sld [smem:[#allocation7]]
  $region13: #{transformer_forward.8} parent=0 // pred_fallthru
    _
  %s36 = sld [smem:[#allocation6]]
  %p37 = scmp.lt.s32.totalorder %s36, 0
  %s38 = scalar_select %p37, %s36, 0
  %s39 = smul.addr %s38, 4
  %s40 = scalar_lea.vmem %s2, %s39
  %s41 = sld [smem:[#allocation7]]
  %p42 = scmp.lt.s32.totalorder %s41, 0
  %s43 = scalar_select %p42, %s41, 0
  %s44 = smul.addr %s43, 4
  %s45 = scalar_lea.vmem %s3, %s44
  %s46 = sld [smem:[#allocation7]]
  %p47 = scmp.lt.s32.totalorder %s46, 0
  %s48 = scalar_select %p47, %s46, 0
  %s49 = smul.addr %s48, 4
  %s50 = scalar_lea.vmem %s4, %s49
  %s51 = sld [smem:[#allocation6]]
  %p52 = scmp.lt.s32.totalorder %s51, 0
  %s53 = scalar_select %p52, %s51, 0
  %s54 = smul.addr %s53, 4
  %s55 = scalar_lea.vmem %s5, %s54
  %s56 = sld [smem:[#allocation6]]
  %p57 = scmp.lt.s32.totalorder %s56, 0
  %s58 = scalar_select %p57, %s56, 0
  %s59 = smul.addr %s58, 4
  %s60 = scalar_lea.vmem %s2, %s59
  %s61 = sld [smem:[#allocation6]]
  %s62 = sld [smem:[#allocation7]]
  %p63 = scmp.lt.s32.totalorder %s62, 0
  %s64 = scalar_select %p63, %s62, 0
  %s65 = smul.addr %s64, 4
  %s66 = scalar_lea.vmem %s3, %s65
  %s67 = sld [smem:[#allocation7]]
  %s68 = sld [smem:[#allocation7]]
  %p69 = scmp.lt.s32.totalorder %s68, 0
  %s70 = scalar_select %p69, %s68, 0
  %s71 = smul.addr %s70, 4
  %s72 = scalar_lea.vmem %s4, %s71
  %s73 = sld [smem:[#allocation7]]
  %s74 = sld [smem:[#allocation6]]
  %p75 = scmp.lt.s32.totalorder %s74, 0
  %s76 = scalar_select %p75, %s74, 0
  %s77 = smul.addr %s76, 4
  %s78 = scalar_lea.vmem %s5, %s77
  %s79 = sld [smem:[#allocation6]]
  %s81 = sld [smem:[#allocation6]]
  %s82 = sld [smem:[#allocation7]]
  %p83 = scmp.eq.s32.totalorder %s82, 0
  // Predicated region
  $region14: #{transformer_forward.8} parent=0 // pred_check
    %p84 = pneg %p83
  $region15: #{transformer_forward.8} parent=0 // pred_check_branch
    %86 = sbr.rel (%p84) target = $region17
  $region16: #{transformer_forward.8} parent=0 // pred_region
    %vm87 = vcmask 7168
    %88 = vst.msk [vmem:[#allocation2] sm:$0xff] %vm87, -1e+30
    %89 = vst.msk [vmem:[#allocation2 + $0x8] sm:$0xff] %vm87, -1e+30
    %90 = vst.msk [vmem:[#allocation2 + $0x10] sm:$0xff] %vm87, -1e+30
    %91 = vst.msk [vmem:[#allocation2 + $0x18] sm:$0xff] %vm87, -1e+30
    %92 = vst.msk [vmem:[#allocation3] sm:$0xff] %vm87, 0.0
    %93 = vst.msk [vmem:[#allocation3 + $0x8] sm:$0xff] %vm87, 0.0
    %94 = vst.msk [vmem:[#allocation3 + $0x10] sm:$0xff] %vm87, 0.0
    %95 = vst.msk [vmem:[#allocation3 + $0x18] sm:$0xff] %vm87, 0.0
    %vm96 = vcmask 130048
    %97 = vst.msk [vmem:[#allocation4] sm:$0xff] %vm96, 0.0
    %98 = vst.msk [vmem:[#allocation4 + $0x8] sm:$0xff] %vm96, 0.0
    %99 = vst.msk [vmem:[#allocation4 + $0x10] sm:$0xff] %vm96, 0.0
    %100 = vst.msk [vmem:[#allocation4 + $0x18] sm:$0xff] %vm96, 0.0
  $region17: #{transformer_forward.8} parent=0 // pred_fallthru
    _
  %v101 = vld [vmem:[%s60] sm:$0xf]
  %v102 = vld [vmem:[%s60 + $0x4] sm:$0xf]
  %v103 = vld [vmem:[%s60 + $0x8] sm:$0xf]
  %v104 = vld [vmem:[%s60 + $0xc] sm:$0xf]
  %v105 = vld [vmem:[%s66] sm:$0xf]
  %v106 = vld [vmem:[%s66 + $0x4] sm:$0xf]
  %v107 = vld [vmem:[%s66 + $0x8] sm:$0xf]
  %v108 = vld [vmem:[%s66 + $0xc] sm:$0xf]
  %vm109 = vcmask 130048
  %v111 = vsel %vm109, %v101, 0
  %v114 = vsel %vm109, %v105, 0
  %116 = vmatprep.subr.bf16.mxu0 0
  %117 = vmatpush1.bf16.xpose.msra.mxu0 0
  %118 = vmatprep.subr.bf16.mxu0 0
  %119 = vmatpush1.bf16.xpose.msra.mxu0 0
  %120 = vmatprep.subr.bf16.mxu0 0
  %121 = vmatpush1.bf16.xpose.msra.mxu0 0
  %122 = vmatprep.subr.bf16.mxu0 0
  %123 = vmatpush1.bf16.xpose.msra.mxu0 0
  %124 = vmatprep.subr.bf16.mxu0 0
  %125 = vmatpush1.bf16.xpose.msra.mxu0 0
  %126 = vmatprep.subr.bf16.mxu0 0
  %127 = vmatpush1.bf16.xpose.msra.mxu0 0
  %128 = vmatprep.subr.bf16.mxu0 0
  %129 = vmatpush1.bf16.xpose.msra.mxu0 0
  %130 = vmatprep.subr.bf16.mxu0 0
  %131 = vmatpush1.bf16.xpose.msra.mxu0 %v114
  %132 = vmatprep.subr.bf16.mxu0 0
  %133 = vmatpush2.bf16.xpose.msra.mxu0 0
  %134 = vmatprep.subr.bf16.mxu0 0
  %135 = vmatpush2.bf16.xpose.msra.mxu0 0
  %136 = vmatprep.subr.bf16.mxu0 0
  %137 = vmatpush2.bf16.xpose.msra.mxu0 0
  %138 = vmatprep.subr.bf16.mxu0 0
  %139 = vmatpush2.bf16.xpose.msra.mxu0 0
  %140 = vmatprep.subr.bf16.mxu0 0
  %141 = vmatpush2.bf16.xpose.msra.mxu0 0
  %142 = vmatprep.subr.bf16.mxu0 0
  %143 = vmatpush2.bf16.xpose.msra.mxu0 0
  %144 = vmatprep.subr.bf16.mxu0 0
  %145 = vmatpush2.bf16.xpose.msra.mxu0 0
  %146 = vmatprep.subr.bf16.mxu0 0
  %147 = vmatpush2.bf16.xpose.msra.mxu0 0
  %148 = vmatprep.mubr.bf16.mxu0 0
  %149 = vmatmul.mubr.bf16.gmra.mxu0 %v111
  %v150 = vpop.f32.mrf.mxu0
  %v151 = vadd.f32 0.0, %v150
  %v152 = vpop.f32.mrf.mxu0
  %v153 = vpop.f32.mrf.mxu0
  %v154 = vpop.f32.mrf.mxu0
  %155 = vdwg.mxu0
  %v157 = vsel %vm109, %v102, 0
  %v160 = vsel %vm109, %v106, 0
  %162 = vmatprep.subr.bf16.mxu0 0
  %163 = vmatpush1.bf16.xpose.msra.mxu0 0
  %164 = vmatprep.subr.bf16.mxu0 0
  %165 = vmatpush1.bf16.xpose.msra.mxu0 0
  %166 = vmatprep.subr.bf16.mxu0 0
  %167 = vmatpush1.bf16.xpose.msra.mxu0 0
  %168 = vmatprep.subr.bf16.mxu0 0
  %169 = vmatpush1.bf16.xpose.msra.mxu0 0
  %170 = vmatprep.subr.bf16.mxu0 0
  %171 = vmatpush1.bf16.xpose.msra.mxu0 0
  %172 = vmatprep.subr.bf16.mxu0 0
  %173 = vmatpush1.bf16.xpose.msra.mxu0 0
  %174 = vmatprep.subr.bf16.mxu0 0
  %175 = vmatpush1.bf16.xpose.msra.mxu0 0
  %176 = vmatprep.subr.bf16.mxu0 0
  %177 = vmatpush1.bf16.xpose.msra.mxu0 %v160
  %178 = vmatprep.subr.bf16.mxu0 0
  %179 = vmatpush2.bf16.xpose.msra.mxu0 0
  %180 = vmatprep.subr.bf16.mxu0 0
  %181 = vmatpush2.bf16.xpose.msra.mxu0 0
  %182 = vmatprep.subr.bf16.mxu0 0
  %183 = vmatpush2.bf16.xpose.msra.mxu0 0
  %184 = vmatprep.subr.bf16.mxu0 0
  %185 = vmatpush2.bf16.xpose.msra.mxu0 0
  %186 = vmatprep.subr.bf16.mxu0 0
  %187 = vmatpush2.bf16.xpose.msra.mxu0 0
  %188 = vmatprep.subr.bf16.mxu0 0
  %189 = vmatpush2.bf16.xpose.msra.mxu0 0
  %190 = vmatprep.subr.bf16.mxu0 0
  %191 = vmatpush2.bf16.xpose.msra.mxu0 0
  %192 = vmatprep.subr.bf16.mxu0 0
  %193 = vmatpush2.bf16.xpose.msra.mxu0 0
  %194 = vmatprep.mubr.bf16.mxu0 0
  %195 = vmatmul.mubr.bf16.gmra.mxu0 %v157
  %v196 = vpop.f32.mrf.mxu0
  %v197 = vadd.f32 0.0, %v196
  %v198 = vpop.f32.mrf.mxu0
  %v199 = vpop.f32.mrf.mxu0
  %v200 = vpop.f32.mrf.mxu0
  %201 = vdwg.mxu0
  %v203 = vsel %vm109, %v103, 0
  %v206 = vsel %vm109, %v107, 0
  %208 = vmatprep.subr.bf16.mxu0 0
  %209 = vmatpush1.bf16.xpose.msra.mxu0 0
  %210 = vmatprep.subr.bf16.mxu0 0
  %211 = vmatpush1.bf16.xpose.msra.mxu0 0
  %212 = vmatprep.subr.bf16.mxu0 0
  %213 = vmatpush1.bf16.xpose.msra.mxu0 0
  %214 = vmatprep.subr.bf16.mxu0 0
  %215 = vmatpush1.bf16.xpose.msra.mxu0 0
  %216 = vmatprep.subr.bf16.mxu0 0
  %217 = vmatpush1.bf16.xpose.msra.mxu0 0
  %218 = vmatprep.subr.bf16.mxu0 0
  %219 = vmatpush1.bf16.xpose.msra.mxu0 0
  %220 = vmatprep.subr.bf16.mxu0 0
  %221 = vmatpush1.bf16.xpose.msra.mxu0 0
  %222 = vmatprep.subr.bf16.mxu0 0
  %223 = vmatpush1.bf16.xpose.msra.mxu0 %v206
  %224 = vmatprep.subr.bf16.mxu0 0
  %225 = vmatpush2.bf16.xpose.msra.mxu0 0
  %226 = vmatprep.subr.bf16.mxu0 0
  %227 = vmatpush2.bf16.xpose.msra.mxu0 0
  %228 = vmatprep.subr.bf16.mxu0 0
  %229 = vmatpush2.bf16.xpose.msra.mxu0 0
  %230 = vmatprep.subr.bf16.mxu0 0
  %231 = vmatpush2.bf16.xpose.msra.mxu0 0
  %232 = vmatprep.subr.bf16.mxu0 0
  %233 = vmatpush2.bf16.xpose.msra.mxu0 0
  %234 = vmatprep.subr.bf16.mxu0 0
  %235 = vmatpush2.bf16.xpose.msra.mxu0 0
  %236 = vmatprep.subr.bf16.mxu0 0
  %237 = vmatpush2.bf16.xpose.msra.mxu0 0
  %238 = vmatprep.subr.bf16.mxu0 0
  %239 = vmatpush2.bf16.xpose.msra.mxu0 0
  %240 = vmatprep.mubr.bf16.mxu0 0
  %241 = vmatmul.mubr.bf16.gmra.mxu0 %v203
  %v242 = vpop.f32.mrf.mxu0
  %v243 = vadd.f32 0.0, %v242
  %v244 = vpop.f32.mrf.mxu0
  %v245 = vpop.f32.mrf.mxu0
  %v246 = vpop.f32.mrf.mxu0
  %247 = vdwg.mxu0
  %v249 = vsel %vm109, %v104, 0
  %v252 = vsel %vm109, %v108, 0
  %254 = vmatprep.subr.bf16.mxu0 0
  %255 = vmatpush1.bf16.xpose.msra.mxu0 0
  %256 = vmatprep.subr.bf16.mxu0 0
  %257 = vmatpush1.bf16.xpose.msra.mxu0 0
  %258 = vmatprep.subr.bf16.mxu0 0
  %259 = vmatpush1.bf16.xpose.msra.mxu0 0
  %260 = vmatprep.subr.bf16.mxu0 0
  %261 = vmatpush1.bf16.xpose.msra.mxu0 0
  %262 = vmatprep.subr.bf16.mxu0 0
  %263 = vmatpush1.bf16.xpose.msra.mxu0 0
  %264 = vmatprep.subr.bf16.mxu0 0
  %265 = vmatpush1.bf16.xpose.msra.mxu0 0
  %266 = vmatprep.subr.bf16.mxu0 0
  %267 = vmatpush1.bf16.xpose.msra.mxu0 0
  %268 = vmatprep.subr.bf16.mxu0 0
  %269 = vmatpush1.bf16.xpose.msra.mxu0 %v252
  %270 = vmatprep.subr.bf16.mxu0 0
  %271 = vmatpush2.bf16.xpose.msra.mxu0 0
  %272 = vmatprep.subr.bf16.mxu0 0
  %273 = vmatpush2.bf16.xpose.msra.mxu0 0
  %274 = vmatprep.subr.bf16.mxu0 0
  %275 = vmatpush2.bf16.xpose.msra.mxu0 0
  %276 = vmatprep.subr.bf16.mxu0 0
  %277 = vmatpush2.bf16.xpose.msra.mxu0 0
  %278 = vmatprep.subr.bf16.mxu0 0
  %279 = vmatpush2.bf16.xpose.msra.mxu0 0
  %280 = vmatprep.subr.bf16.mxu0 0
  %281 = vmatpush2.bf16.xpose.msra.mxu0 0
  %282 = vmatprep.subr.bf16.mxu0 0
  %283 = vmatpush2.bf16.xpose.msra.mxu0 0
  %284 = vmatprep.subr.bf16.mxu0 0
  %285 = vmatpush2.bf16.xpose.msra.mxu0 0
  %286 = vmatprep.mubr.bf16.mxu0 0
  %287 = vmatmul.mubr.bf16.gmra.mxu0 %v249
  %v288 = vpop.f32.mrf.mxu0
  %v289 = vadd.f32 0.0, %v288
  %v290 = vpop.f32.mrf.mxu0
  %v291 = vpop.f32.mrf.mxu0
  %v292 = vpop.f32.mrf.mxu0
  %293 = vdwg.mxu0
  %s294 = smul.u32 %s81, 8
  %v295 = vlaneseq
  %v296 = vshrl.u32 %v295, 7
  %v297 = vstv %s294
  %v298 = vadd.s32 %v297, %v296
  %s299 = smul.u32 %s82, 8
  %v300 = vlaneseq
  %v301 = vand.u32 %v300, 127
  %v302 = vstv %s299
  %v303 = vadd.s32 %v302, %v301
  %vm304 = vcmp.le.s32.totalorder %v303, %v298
  %v305 = vsel %vm304, 1, 0
  %vm306 = vcmp.eq.s32.totalorder %v305, 1
  %v307 = vsel %vm306, %v151, -1e+30
  %v308 = vsel %vm306, %v197, -1e+30
  %v309 = vsel %vm306, %v243, -1e+30
  %v310 = vsel %vm306, %v289, -1e+30
  %v311 = vld [vmem:[#allocation2] sm:$0xff]
  %v312 = vld [vmem:[#allocation2 + $0x8] sm:$0xff]
  %v313 = vld [vmem:[#allocation2 + $0x10] sm:$0xff]
  %v314 = vld [vmem:[#allocation2 + $0x18] sm:$0xff]
  %vm315 = vcmask 64512
  %v316 = vsel %vm315, %v307, -inf
  %317 = vmax.xlane.f32.xlu0 %v316
  %v318 = vpop.xlane.xlu0 %317
  %v319 = vsel %vm315, %v308, -inf
  %320 = vmax.xlane.f32.xlu0 %v319
  %v321 = vpop.xlane.xlu0 %320
  %v322 = vsel %vm315, %v309, -inf
  %323 = vmax.xlane.f32.xlu0 %v322
  %v324 = vpop.xlane.xlu0 %323
  %v325 = vsel %vm315, %v310, -inf
  %326 = vmax.xlane.f32.xlu0 %v325
  %v327 = vpop.xlane.xlu0 %326
  %v328 = vmax.f32 %v311, %v318
  %v329 = vmax.f32 %v312, %v321
  %v330 = vmax.f32 %v313, %v324
  %v331 = vmax.f32 %v314, %v327
  %v332 = vsub.f32 %v311, %v328
  %v333 = vsub.f32 %v312, %v329
  %v334 = vsub.f32 %v313, %v330
  %v335 = vsub.f32 %v314, %v331
  %v336 = vmul.f32 %v332, 1.442695
  %v337 = vpow.pop %v336
  %v338 = vmul.f32 %v333, 1.442695
  %v339 = vpow.pop %v338
  %v340 = vmul.f32 %v334, 1.442695
  %v341 = vpow.pop %v340
  %v342 = vmul.f32 %v335, 1.442695
  %v343 = vpow.pop %v342
  %345 = vset.pattern.permute.xlu0 0
  %346 = vperm.xlu0 %345, %v328
  %v347 = vpop.permute.xlu0 %346
  %350 = vset.pattern.permute.xlu0 0
  %351 = vperm.xlu0 %350, %v329
  %v352 = vpop.permute.xlu0 %351
  %355 = vset.pattern.permute.xlu0 0
  %356 = vperm.xlu0 %355, %v330
  %v357 = vpop.permute.xlu0 %356
  %360 = vset.pattern.permute.xlu0 0
  %361 = vperm.xlu0 %360, %v331
  %v362 = vpop.permute.xlu0 %361
  %v364 = vsub.f32 %v307, %v347
  %v365 = vsub.f32 %v308, %v352
  %v366 = vsub.f32 %v309, %v357
  %v367 = vsub.f32 %v310, %v362
  %v368 = vmul.f32 %v364, 1.442695
  %v369 = vpow.pop %v368
  %v370 = vmul.f32 %v365, 1.442695
  %v371 = vpow.pop %v370
  %v372 = vmul.f32 %v366, 1.442695
  %v373 = vpow.pop %v372
  %v374 = vmul.f32 %v367, 1.442695
  %v375 = vpow.pop %v374
  %v376 = vld [vmem:[#allocation3] sm:$0xff]
  %v377 = vld [vmem:[#allocation3 + $0x8] sm:$0xff]
  %v378 = vld [vmem:[#allocation3 + $0x10] sm:$0xff]
  %v379 = vld [vmem:[#allocation3 + $0x18] sm:$0xff]
  %v380 = vmul.f32 %v337, %v376
  %v381 = vmul.f32 %v339, %v377
  %v382 = vmul.f32 %v341, %v378
  %v383 = vmul.f32 %v343, %v379
  %v384 = vsel %vm315, %v369, 0.0
  %385 = vadd.xlane.f32.xlu0 %v384
  %v386 = vpop.xlane.xlu0 %385
  %v387 = vsel %vm315, %v371, 0.0
  %388 = vadd.xlane.f32.xlu0 %v387
  %v389 = vpop.xlane.xlu0 %388
  %v390 = vsel %vm315, %v373, 0.0
  %391 = vadd.xlane.f32.xlu0 %v390
  %v392 = vpop.xlane.xlu0 %391
  %v393 = vsel %vm315, %v375, 0.0
  %394 = vadd.xlane.f32.xlu0 %v393
  %v395 = vpop.xlane.xlu0 %394
  %v396 = vadd.f32 %v380, %v386
  %v397 = vadd.f32 %v381, %v389
  %v398 = vadd.f32 %v382, %v392
  %v399 = vadd.f32 %v383, %v395
  %vm400 = vcmask 7168
  %401 = vst.msk [vmem:[#allocation3] sm:$0xff] %vm400, %v396
  %402 = vst.msk [vmem:[#allocation3 + $0x8] sm:$0xff] %vm400, %v397
  %403 = vst.msk [vmem:[#allocation3 + $0x10] sm:$0xff] %vm400, %v398
  %404 = vst.msk [vmem:[#allocation3 + $0x18] sm:$0xff] %vm400, %v399
  %v405 = vld [vmem:[#allocation4] sm:$0xff]
  %v406 = vld [vmem:[#allocation4 + $0x8] sm:$0xff]
  %v407 = vld [vmem:[#allocation4 + $0x10] sm:$0xff]
  %v408 = vld [vmem:[#allocation4 + $0x18] sm:$0xff]
  %410 = vset.pattern.permute.xlu0 0
  %411 = vperm.xlu0 %410, %v337
  %v412 = vpop.permute.xlu0 %411
  %415 = vset.pattern.permute.xlu0 0
  %416 = vperm.xlu0 %415, %v339
  %v417 = vpop.permute.xlu0 %416
  %420 = vset.pattern.permute.xlu0 0
  %421 = vperm.xlu0 %420, %v341
  %v422 = vpop.permute.xlu0 %421
  %425 = vset.pattern.permute.xlu0 0
  %426 = vperm.xlu0 %425, %v343
  %v427 = vpop.permute.xlu0 %426
  %v429 = vmul.f32 %v412, %v405
  %v430 = vmul.f32 %v417, %v406
  %v431 = vmul.f32 %v422, %v407
  %v432 = vmul.f32 %v427, %v408
  %v433 = vpack.c.bf16 %v369, %v369
  %v434 = vpack.c.bf16 %v371, %v371
  %v435 = vpack.c.bf16 %v373, %v373
  %v436 = vpack.c.bf16 %v375, %v375
  %v437 = vld [vmem:[%s72] sm:$0xf]
  %v438 = vld [vmem:[%s72 + $0x4] sm:$0xf]
  %v439 = vld [vmem:[%s72 + $0x8] sm:$0xf]
  %v440 = vld [vmem:[%s72 + $0xc] sm:$0xf]
  %v442 = vsel %vm315, %v433, 0
  %vm444 = vcmask 1043456
  %v446 = vsel %vm444, %v437, 0
  %448 = vmatprep.subr.bf16.mxu0 0
  %449 = vmatpush1.bf16.msra.mxu0 0
  %450 = vmatprep.subr.bf16.mxu0 0
  %451 = vmatpush1.bf16.msra.mxu0 0
  %452 = vmatprep.subr.bf16.mxu0 0
  %453 = vmatpush1.bf16.msra.mxu0 0
  %454 = vmatprep.subr.bf16.mxu0 0
  %455 = vmatpush1.bf16.msra.mxu0 0
  %456 = vmatprep.subr.bf16.mxu0 0
  %457 = vmatpush1.bf16.msra.mxu0 0
  %458 = vmatprep.subr.bf16.mxu0 0
  %459 = vmatpush1.bf16.msra.mxu0 0
  %460 = vmatprep.subr.bf16.mxu0 0
  %461 = vmatpush1.bf16.msra.mxu0 0
  %462 = vmatprep.subr.bf16.mxu0 0
  %463 = vmatpush1.bf16.msra.mxu0 %v446
  %464 = vmatprep.subr.bf16.mxu0 0
  %465 = vmatpush2.bf16.msra.mxu0 0
  %466 = vmatprep.subr.bf16.mxu0 0
  %467 = vmatpush2.bf16.msra.mxu0 0
  %468 = vmatprep.subr.bf16.mxu0 0
  %469 = vmatpush2.bf16.msra.mxu0 0
  %470 = vmatprep.subr.bf16.mxu0 0
  %471 = vmatpush2.bf16.msra.mxu0 0
  %472 = vmatprep.subr.bf16.mxu0 0
  %473 = vmatpush2.bf16.msra.mxu0 0
  %474 = vmatprep.subr.bf16.mxu0 0
  %475 = vmatpush2.bf16.msra.mxu0 0
  %476 = vmatprep.subr.bf16.mxu0 0
  %477 = vmatpush2.bf16.msra.mxu0 0
  %478 = vmatprep.subr.bf16.mxu0 0
  %479 = vmatpush2.bf16.msra.mxu0 0
  %480 = vmatprep.mubr.bf16.mxu0 0
  %481 = vmatmul.mubr.bf16.gmra.mxu0 %v442
  %v482 = vpop.f32.mrf.mxu0
  %v483 = vadd.f32 0.0, %v482
  %v484 = vpop.f32.mrf.mxu0
  %v485 = vpop.f32.mrf.mxu0
  %v486 = vpop.f32.mrf.mxu0
  %487 = vdwg.mxu0
  %v489 = vsel %vm315, %v434, 0
  %v492 = vsel %vm444, %v438, 0
  %494 = vmatprep.subr.bf16.mxu0 0
  %495 = vmatpush1.bf16.msra.mxu0 0
  %496 = vmatprep.subr.bf16.mxu0 0
  %497 = vmatpush1.bf16.msra.mxu0 0
  %498 = vmatprep.subr.bf16.mxu0 0
  %499 = vmatpush1.bf16.msra.mxu0 0
  %500 = vmatprep.subr.bf16.mxu0 0
  %501 = vmatpush1.bf16.msra.mxu0 0
  %502 = vmatprep.subr.bf16.mxu0 0
  %503 = vmatpush1.bf16.msra.mxu0 0
  %504 = vmatprep.subr.bf16.mxu0 0
  %505 = vmatpush1.bf16.msra.mxu0 0
  %506 = vmatprep.subr.bf16.mxu0 0
  %507 = vmatpush1.bf16.msra.mxu0 0
  %508 = vmatprep.subr.bf16.mxu0 0
  %509 = vmatpush1.bf16.msra.mxu0 %v492
  %510 = vmatprep.subr.bf16.mxu0 0
  %511 = vmatpush2.bf16.msra.mxu0 0
  %512 = vmatprep.subr.bf16.mxu0 0
  %513 = vmatpush2.bf16.msra.mxu0 0
  %514 = vmatprep.subr.bf16.mxu0 0
  %515 = vmatpush2.bf16.msra.mxu0 0
  %516 = vmatprep.subr.bf16.mxu0 0
  %517 = vmatpush2.bf16.msra.mxu0 0
  %518 = vmatprep.subr.bf16.mxu0 0
  %519 = vmatpush2.bf16.msra.mxu0 0
  %520 = vmatprep.subr.bf16.mxu0 0
  %521 = vmatpush2.bf16.msra.mxu0 0
  %522 = vmatprep.subr.bf16.mxu0 0
  %523 = vmatpush2.bf16.msra.mxu0 0
  %524 = vmatprep.subr.bf16.mxu0 0
  %525 = vmatpush2.bf16.msra.mxu0 0
  %526 = vmatprep.mubr.bf16.mxu0 0
  %527 = vmatmul.mubr.bf16.gmra.mxu0 %v489
  %v528 = vpop.f32.mrf.mxu0
  %v529 = vadd.f32 0.0, %v528
  %v530 = vpop.f32.mrf.mxu0
  %v531 = vpop.f32.mrf.mxu0
  %v532 = vpop.f32.mrf.mxu0
  %533 = vdwg.mxu0
  %v535 = vsel %vm315, %v435, 0
  %v538 = vsel %vm444, %v439, 0
  %540 = vmatprep.subr.bf16.mxu0 0
  %541 = vmatpush1.bf16.msra.mxu0 0
  %542 = vmatprep.subr.bf16.mxu0 0
  %543 = vmatpush1.bf16.msra.mxu0 0
  %544 = vmatprep.subr.bf16.mxu0 0
  %545 = vmatpush1.bf16.msra.mxu0 0
  %546 = vmatprep.subr.bf16.mxu0 0
  %547 = vmatpush1.bf16.msra.mxu0 0
  %548 = vmatprep.subr.bf16.mxu0 0
  %549 = vmatpush1.bf16.msra.mxu0 0
  %550 = vmatprep.subr.bf16.mxu0 0
  %551 = vmatpush1.bf16.msra.mxu0 0
  %552 = vmatprep.subr.bf16.mxu0 0
  %553 = vmatpush1.bf16.msra.mxu0 0
  %554 = vmatprep.subr.bf16.mxu0 0
  %555 = vmatpush1.bf16.msra.mxu0 %v538
  %556 = vmatprep.subr.bf16.mxu0 0
  %557 = vmatpush2.bf16.msra.mxu0 0
  %558 = vmatprep.subr.bf16.mxu0 0
  %559 = vmatpush2.bf16.msra.mxu0 0
  %560 = vmatprep.subr.bf16.mxu0 0
  %561 = vmatpush2.bf16.msra.mxu0 0
  %562 = vmatprep.subr.bf16.mxu0 0
  %563 = vmatpush2.bf16.msra.mxu0 0
  %564 = vmatprep.subr.bf16.mxu0 0
  %565 = vmatpush2.bf16.msra.mxu0 0
  %566 = vmatprep.subr.bf16.mxu0 0
  %567 = vmatpush2.bf16.msra.mxu0 0
  %568 = vmatprep.subr.bf16.mxu0 0
  %569 = vmatpush2.bf16.msra.mxu0 0
  %570 = vmatprep.subr.bf16.mxu0 0
  %571 = vmatpush2.bf16.msra.mxu0 0
  %572 = vmatprep.mubr.bf16.mxu0 0
  %573 = vmatmul.mubr.bf16.gmra.mxu0 %v535
  %v574 = vpop.f32.mrf.mxu0
  %v575 = vadd.f32 0.0, %v574
  %v576 = vpop.f32.mrf.mxu0
  %v577 = vpop.f32.mrf.mxu0
  %v578 = vpop.f32.mrf.mxu0
  %579 = vdwg.mxu0
  %v581 = vsel %vm315, %v436, 0
  %v584 = vsel %vm444, %v440, 0
  %586 = vmatprep.subr.bf16.mxu0 0
  %587 = vmatpush1.bf16.msra.mxu0 0
  %588 = vmatprep.subr.bf16.mxu0 0
  %589 = vmatpush1.bf16.msra.mxu0 0
  %590 = vmatprep.subr.bf16.mxu0 0
  %591 = vmatpush1.bf16.msra.mxu0 0
  %592 = vmatprep.subr.bf16.mxu0 0
  %593 = vmatpush1.bf16.msra.mxu0 0
  %594 = vmatprep.subr.bf16.mxu0 0
  %595 = vmatpush1.bf16.msra.mxu0 0
  %596 = vmatprep.subr.bf16.mxu0 0
  %597 = vmatpush1.bf16.msra.mxu0 0
  %598 = vmatprep.subr.bf16.mxu0 0
  %599 = vmatpush1.bf16.msra.mxu0 0
  %600 = vmatprep.subr.bf16.mxu0 0
  %601 = vmatpush1.bf16.msra.mxu0 %v584
  %602 = vmatprep.subr.bf16.mxu0 0
  %603 = vmatpush2.bf16.msra.mxu0 0
  %604 = vmatprep.subr.bf16.mxu0 0
  %605 = vmatpush2.bf16.msra.mxu0 0
  %606 = vmatprep.subr.bf16.mxu0 0
  %607 = vmatpush2.bf16.msra.mxu0 0
  %608 = vmatprep.subr.bf16.mxu0 0
  %609 = vmatpush2.bf16.msra.mxu0 0
  %610 = vmatprep.subr.bf16.mxu0 0
  %611 = vmatpush2.bf16.msra.mxu0 0
  %612 = vmatprep.subr.bf16.mxu0 0
  %613 = vmatpush2.bf16.msra.mxu0 0
  %614 = vmatprep.subr.bf16.mxu0 0
  %615 = vmatpush2.bf16.msra.mxu0 0
  %616 = vmatprep.subr.bf16.mxu0 0
  %617 = vmatpush2.bf16.msra.mxu0 0
  %618 = vmatprep.mubr.bf16.mxu0 0
  %619 = vmatmul.mubr.bf16.gmra.mxu0 %v581
  %v620 = vpop.f32.mrf.mxu0
  %v621 = vadd.f32 0.0, %v620
  %v622 = vpop.f32.mrf.mxu0
  %v623 = vpop.f32.mrf.mxu0
  %v624 = vpop.f32.mrf.mxu0
  %625 = vdwg.mxu0
  %v626 = vadd.f32 %v429, %v483
  %v627 = vadd.f32 %v430, %v529
  %v628 = vadd.f32 %v431, %v575
  %v629 = vadd.f32 %v432, %v621
  %630 = vst.msk [vmem:[#allocation4] sm:$0xff] %vm109, %v626
  %631 = vst.msk [vmem:[#allocation4 + $0x8] sm:$0xff] %vm109, %v627
  %632 = vst.msk [vmem:[#allocation4 + $0x10] sm:$0xff] %vm109, %v628
  %633 = vst.msk [vmem:[#allocation4 + $0x18] sm:$0xff] %vm109, %v629
  %634 = vst.msk [vmem:[#allocation2] sm:$0xff] %vm400, %v328
  %635 = vst.msk [vmem:[#allocation2 + $0x8] sm:$0xff] %vm400, %v329
  %636 = vst.msk [vmem:[#allocation2 + $0x10] sm:$0xff] %vm400, %v330
  %637 = vst.msk [vmem:[#allocation2 + $0x18] sm:$0xff] %vm400, %v331
  %p638 = scmp.eq.s32.totalorder %s82, %s81
  // Predicated region
  $region18: #{transformer_forward.8} parent=0 // pred_check
    %p639 = pneg %p638
  $region19: #{transformer_forward.8} parent=0 // pred_check_branch
    %641 = sbr.rel (%p639) target = $region21
  $region20: #{transformer_forward.8} parent=0 // pred_region
    %v642 = vld [vmem:[#allocation4] sm:$0xff]
    %v643 = vld [vmem:[#allocation4 + $0x8] sm:$0xff]
    %v644 = vld [vmem:[#allocation4 + $0x10] sm:$0xff]
    %v645 = vld [vmem:[#allocation4 + $0x18] sm:$0xff]
    %v646 = vld [vmem:[#allocation3] sm:$0xff]
    %v647 = vld [vmem:[#allocation3 + $0x8] sm:$0xff]
    %v648 = vld [vmem:[#allocation3 + $0x10] sm:$0xff]
    %v649 = vld [vmem:[#allocation3 + $0x18] sm:$0xff]
    %v650 = vrcp.pop %v646
    %v651 = vrcp.pop %v647
    %v652 = vrcp.pop %v648
    %v653 = vrcp.pop %v649
    %655 = vset.pattern.permute.xlu0 0
    %656 = vperm.xlu0 %655, %v650
    %v657 = vpop.permute.xlu0 %656
    %660 = vset.pattern.permute.xlu0 0
    %661 = vperm.xlu0 %660, %v651
    %v662 = vpop.permute.xlu0 %661
    %665 = vset.pattern.permute.xlu0 0
    %666 = vperm.xlu0 %665, %v652
    %v667 = vpop.permute.xlu0 %666
    %670 = vset.pattern.permute.xlu0 0
    %671 = vperm.xlu0 %670, %v653
    %v672 = vpop.permute.xlu0 %671
    %v674 = vmul.f32 %v642, %v657
    %v675 = vmul.f32 %v643, %v662
    %v676 = vmul.f32 %v644, %v667
    %v677 = vmul.f32 %v645, %v672
    %v678 = vpack.c.bf16 %v674, %v674
    %v679 = vpack.c.bf16 %v675, %v675
    %v680 = vpack.c.bf16 %v676, %v676
    %v681 = vpack.c.bf16 %v677, %v677
    %vm682 = vcmask 125952
    %683 = vst.msk [vmem:[%s78] sm:$0xf] %vm682, %v678
    %684 = vst.msk [vmem:[%s78 + $0x4] sm:$0xf] %vm682, %v679
    %685 = vst.msk [vmem:[%s78 + $0x8] sm:$0xf] %vm682, %v680
    %686 = vst.msk [vmem:[%s78 + $0xc] sm:$0xf] %vm682, %v681
  $region21: #{transformer_forward.8} parent=0 // pred_fallthru
    _
  %s687 = sld [smem:[#allocation6]]
  %p688 = scmp.lt.s32.totalorder %s687, 0
  %s689 = scalar_select %p688, %s687, 0
  %s690 = smul.addr %s689, 4
  %s691 = scalar_lea.vmem %s5, %s690
  // Predicated region
  $region22: #{transformer_forward.8} parent=0 // pred_check
    _
  $region23: #{transformer_forward.8} parent=0 // pred_check_branch
    %693 = sbr.rel (0) target = $region25
  $region24: #{transformer_forward.8} parent=0 // pred_region
    %s694 = sld [smem:[#allocation6]]
  $region25: #{transformer_forward.8} parent=0 // pred_fallthru
    _
  // Predicated region
  $region26: #{transformer_forward.8} parent=0 // pred_check
    _
  $region27: #{transformer_forward.8} parent=0 // pred_check_branch
    %696 = sbr.rel (0) target = $region29
  $region28: #{transformer_forward.8} parent=0 // pred_region
    %s697 = sld [smem:[#allocation6]]
    %p698 = scmp.lt.s32.totalorder %s697, 0
    %s699 = scalar_select %p698, %s697, 0
    %s700 = smul.addr %s699, 4
    %s701 = scalar_lea.vmem %s5, %s700
  $region29: #{transformer_forward.8} parent=0 // pred_fallthru
    _

</llo_original>
